<compile_context>
chip_gen: v7x
topology: tpu7x:2x2x1
jax: 0.10.0
libtpu: 0.0.40
codegen_flags: <defaults>
</compile_context>

<pallas_src>
import functools

import jax
import jax.numpy as jnp
from jax.experimental import pallas as pl
from jax.experimental.pallas import tpu as pltpu


# --------------------------- fused forward kernel ----------------------------
def _fused_lstm_kernel(*refs, n_layers: int, T: int, Bp: int, H: int):
    # in refs : x (T*Bp, Din) bf16, fc_in_w (Din, H) bf16, fc_in_b (1, H) f32,
    #           gate_scale (Bp, 4H) f32, gate_offset (Bp, 4H) f32,
    #           [w_ih (Hin, 4H) bf16, w_hh (H, 4H) bf16, b (1, 4H) f32] * n_layers,
    #           fc_out_w (H, DoutP) bf16, fc_out_b (1, DoutP) f32
    # out refs: o (T*Bp, DoutP) f32
    # scratch : seq (T*Bp, H) f32, gates (T*Bp, 4H) f32
    x_ref, fc_in_w_ref, fc_in_b_ref, gscale_ref, goff_ref = refs[:5]
    layer_refs = refs[5:5 + 3 * n_layers]
    fc_out_w_ref = refs[5 + 3 * n_layers]
    fc_out_b_ref = refs[6 + 3 * n_layers]
    o_ref = refs[7 + 3 * n_layers]
    seq_scr = refs[8 + 3 * n_layers]
    gates_scr = refs[9 + 3 * n_layers]

    # fc_in for all timesteps at once: (T*Bp, Din) @ (Din, H), bf16 MXU operands, f32 accumulate.
    seq_scr[...] = (
        jnp.dot(x_ref[...], fc_in_w_ref[...], preferred_element_type=jnp.float32)
        + fc_in_b_ref[...]
    )

    # Hoisted once (no per-iteration broadcast_in_dim in the unrolled loop).
    gscale = gscale_ref[...]   # (Bp, 4H): 0.5 for i/f/o columns, 1.0 for g
    goff = goff_ref[...]       # (Bp, 4H): 0.5 for i/f/o columns, 0.0 for g

    for l in range(n_layers):
        w_ih = layer_refs[3 * l + 0][...]   # (Hin, 4H) bf16, i/f/o columns pre-halved
        # Hoisting w_hh into a value is fine at H=32 (few vregs); at larger H keep it in the ref
        # (or in MXU weight regs via pltpu.matmul_push_rhs) to avoid register-file blowup.
        w_hh = layer_refs[3 * l + 1][...]   # (H, 4H) bf16, i/f/o columns pre-halved
        b = layer_refs[3 * l + 2][...]      # (1, 4H) f32, 0.5*(b_ih+b_hh) on i/f/o columns

        # Input projection hoisted off the serial recurrence:
        # (T*Bp, Hin) @ (Hin, 4H) + folded bias, for the whole sequence at once.
        gates_scr[...] = (
            jnp.dot(seq_scr[...].astype(jnp.bfloat16), w_ih,
                    preferred_element_type=jnp.float32)
            + b
        )

        h = jnp.zeros((Bp, H), jnp.float32)
        c = jnp.zeros((Bp, H), jnp.float32)
        # Fully-unrolled time recurrence (T static & small).  Every slice below starts at a
        # multiple of 8 sublanes -> tile-aligned, unmasked accesses.
        # TODO(synk): for larger T switch to lax.fori_loop(..., unroll=k) to cap code size.
        for t in range(T):
            pre = gates_scr[t * Bp:(t + 1) * Bp, :] + jnp.dot(
                h.astype(jnp.bfloat16), w_hh, preferred_element_type=jnp.float32
            )  # (Bp, 4H); PyTorch gate order i, f, g, o; i/f/o already halved
            tg = jnp.tanh(pre)                    # ONE EUP pass for all four gates
            g_all = gscale * tg + goff            # i/f/o -> sigmoid(x), g -> tanh(x)
            c = g_all[:, H:2 * H] * c + g_all[:, 0:H] * g_all[:, 2 * H:3 * H]
            h = g_all[:, 3 * H:4 * H] * jnp.tanh(c)
            # Layer output stays resident in VMEM; becomes the next layer's input.
            seq_scr[t * Bp:(t + 1) * Bp, :] = h

    # fc_out + tanh; lane-dense (DoutP=128) output -> single unmasked writeback to HBM.
    o_ref[...] = jnp.tanh(
        jnp.dot(seq_scr[...].astype(jnp.bfloat16), fc_out_w_ref[...],
                preferred_element_type=jnp.float32)
        + fc_out_b_ref[...]
    ).astype(o_ref.dtype)


# ------------------------------ wrappers --------------------------------------
def prepare_params(params, *, lane_pad=128):
    """One-time parameter prep: transpose to (Din, Dout), fold LSTM biases, pre-halve i/f/o
    gate columns (sigmoid(x)=0.5*tanh(x/2)+0.5), cast matmul weights to bf16, pad fc_out to
    a lane-dense 128-wide output."""
    f32, bf16 = jnp.float32, jnp.bfloat16
    H = params["fc_in_w"].shape[0]
    Dout = params["fc_out_w"].shape[0]
    DoutP = ((Dout + lane_pad - 1) // lane_pad) * lane_pad

    # Column scale: 0.5 for i/f/o gate blocks, 1.0 for the g (candidate) block.
    col_scale = jnp.concatenate([
        jnp.full((H,), 0.5, f32), jnp.full((H,), 0.5, f32),
        jnp.ones((H,), f32), jnp.full((H,), 0.5, f32)])
    gate_offset = jnp.concatenate([
        jnp.full((H,), 0.5, f32), jnp.full((H,), 0.5, f32),
        jnp.zeros((H,), f32), jnp.full((H,), 0.5, f32)])

    fc_out_w_t = jnp.asarray(params["fc_out_w"], f32).T                      # (H, Dout)
    fc_out_w_p = jnp.zeros((H, DoutP), f32).at[:, :Dout].set(fc_out_w_t)
    fc_out_b_p = jnp.zeros((1, DoutP), f32).at[0, :Dout].set(
        jnp.asarray(params["fc_out_b"], f32))

    prep = {
        "H": H, "Dout": Dout, "DoutP": DoutP,
        "fc_in_w_t": jnp.asarray(params["fc_in_w"], f32).T.astype(bf16),     # (Din, H)
        "fc_in_b": jnp.asarray(params["fc_in_b"], f32).reshape(1, H),
        "gate_scale": col_scale.reshape(1, 4 * H),
        "gate_offset": gate_offset.reshape(1, 4 * H),
        "layers": [],
        "fc_out_w_t": fc_out_w_p.astype(bf16),                               # (H, DoutP)
        "fc_out_b": fc_out_b_p,
    }
    for layer in params["lstm"]:
        w_ih_t = jnp.asarray(layer["w_ih"], f32).T * col_scale               # (Hin, 4H)
        w_hh_t = jnp.asarray(layer["w_hh"], f32).T * col_scale               # (H, 4H)
        b = (jnp.asarray(layer["b_ih"], f32) + jnp.asarray(layer["b_hh"], f32)) * col_scale
        prep["layers"].append({
            "w_ih_t": w_ih_t.astype(bf16),
            "w_hh_t": w_hh_t.astype(bf16),
            "b": b.reshape(1, -1),                                           # (1, 4H) f32
        })
    return prep


def lstm_model_forward(x, prep):
    """x: (T, B, input_size) -> flattened (T*B*output_size,) like torch .flatten()."""
    T, B, Din = x.shape
    H, Dout, DoutP = prep["H"], prep["Dout"], prep["DoutP"]
    n_layers = len(prep["layers"])
    Bp = max(8, ((B + 7) // 8) * 8)   # pad batch to full sublane tiles

    x_p = jnp.zeros((T, Bp, Din), jnp.float32).at[:, :B, :].set(x)
    inputs = [
        x_p.reshape(T * Bp, Din).astype(jnp.bfloat16),
        prep["fc_in_w_t"], prep["fc_in_b"],
        jnp.tile(prep["gate_scale"], (Bp, 1)),
        jnp.tile(prep["gate_offset"], (Bp, 1)),
    ]
    for layer in prep["layers"]:
        inputs += [layer["w_ih_t"], layer["w_hh_t"], layer["b"]]
    inputs += [prep["fc_out_w_t"], prep["fc_out_b"]]

    # Rough cost hint so XLA doesn't mis-schedule around a tiny latency-bound kernel.
    flops = 2 * T * Bp * (Din * H + n_layers * (2 * H * 4 * H) + H * DoutP)
    transcendentals = T * Bp * (n_layers * 5 * H + DoutP)
    bytes_accessed = int(sum(a.size * a.dtype.itemsize for a in inputs)
                         + T * Bp * DoutP * 4)

    kern = functools.partial(_fused_lstm_kernel, n_layers=n_layers, T=T, Bp=Bp, H=H)
    out = pl.pallas_call(
        kern,
        out_shape=jax.ShapeDtypeStruct((T * Bp, DoutP), jnp.float32),
        scratch_shapes=[
            pltpu.VMEM((T * Bp, H), jnp.float32),      # activation slab (layer in/out)
            pltpu.VMEM((T * Bp, 4 * H), jnp.float32),  # hoisted gate pre-activations
        ],
        compiler_params=pltpu.CompilerParams(vmem_limit_bytes=32 * 1024 * 1024),
        cost_estimate=pl.CostEstimate(
            flops=flops, transcendentals=transcendentals, bytes_accessed=bytes_accessed
        ),
    )(*inputs)
    return out.reshape(T, Bp, DoutP)[:, :B, :Dout].reshape(-1)


# ---------------------------- pure-JAX reference ------------------------------
def _reference_forward(x, params, *, bf16_matmul=False):
    """Straight port of the PyTorch forward.  With bf16_matmul=True the matmul operands are
    cast to bf16 (f32 accumulate) at exactly the same points as the kernel, so the comparison
    isolates kernel logic from bf16 quantization."""
    def mm(a, b):
        if bf16_matmul:
            a, b = a.astype(jnp.bfloat16), b.astype(jnp.bfloat16)
        return jnp.dot(a, b, preferred_element_type=jnp.float32)

    T, B, _ = x.shape
    hidden = params["fc_in_w"].shape[0]
    h = mm(x.reshape(T * B, -1), params["fc_in_w"].T) + params["fc_in_b"]
    h = h.reshape(T, B, hidden)
    for layer in params["lstm"]:
        H = hidden
        ht = jnp.zeros((B, H), jnp.float32)
        ct = jnp.zeros((B, H), jnp.float32)
        outs = []
        for t in range(T):
            gates = (mm(h[t], layer["w_ih"].T) + layer["b_ih"]
                     + mm(ht, layer["w_hh"].T) + layer["b_hh"])
            i_g = jax.nn.sigmoid(gates[:, 0 * H:1 * H])
            f_g = jax.nn.sigmoid(gates[:, 1 * H:2 * H])
            g_g = jnp.tanh(gates[:, 2 * H:3 * H])
            o_g = jax.nn.sigmoid(gates[:, 3 * H:4 * H])
            ct = f_g * ct + i_g * g_g
            ht = o_g * jnp.tanh(ct)
            outs.append(ht)
        h = jnp.stack(outs, axis=0)
    y = jnp.tanh(mm(h.reshape(T * B, hidden), params["fc_out_w"].T) + params["fc_out_b"])
    return y.reshape(-1)


# ------------------------------ param init ------------------------------------
def init_params(key, hidden_dim, n_layers, input_size, output_size):
    def uni(k, shape, bound):
        return jax.random.uniform(k, shape, jnp.float32, -bound, bound)

    keys = jax.random.split(key, 4 + 4 * n_layers)
    kb = 1.0 / jnp.sqrt(jnp.float32(hidden_dim))
    ki = 1.0 / jnp.sqrt(jnp.float32(input_size))
    params = {
        "fc_in_w": uni(keys[0], (hidden_dim, input_size), ki),
        "fc_in_b": uni(keys[1], (hidden_dim,), ki),
        "fc_out_w": uni(keys[2], (output_size, hidden_dim), kb),
        "fc_out_b": uni(keys[3], (output_size,), kb),
        "lstm": [],
    }
    for l in range(n_layers):
        base = 4 + 4 * l
        params["lstm"].append({
            "w_ih": uni(keys[base + 0], (4 * hidden_dim, hidden_dim), kb),
            "w_hh": uni(keys[base + 1], (4 * hidden_dim, hidden_dim), kb),
            "b_ih": uni(keys[base + 2], (4 * hidden_dim,), kb),
            "b_hh": uni(keys[base + 3], (4 * hidden_dim,), kb),
        })
    return params


if __name__ == "__main__":
    hidden_dim, n_layers, input_size, output_size = 32, 2, 4, 4
    seq_len, batch = 8, 2

    key = jax.random.PRNGKey(0)
    pkey, xkey = jax.random.split(key)
    params = init_params(pkey, hidden_dim, n_layers, input_size, output_size)
    x = jax.random.normal(xkey, (seq_len, batch, input_size), jnp.float32)

    prep = prepare_params(params)          # one-time transpose / bias fold / gate scaling / bf16
    out = jax.block_until_ready(lstm_model_forward(x, prep))
    assert out.shape == (seq_len * batch * output_size,)

    # Precision-matched check: reference uses bf16 matmul operands at the same points as the
    # kernel, so this validates the kernel logic tightly.
    ref_bf16 = _reference_forward(x, params, bf16_matmul=True)
    assert jnp.allclose(out, ref_bf16, atol=5e-3, rtol=5e-3), "mismatch vs bf16-matched reference"

    # Coarse sanity bound vs the full-f32 reference (difference = bf16 MXU operand quantization).
    ref_f32 = _reference_forward(x, params, bf16_matmul=False)
    assert jnp.allclose(out, ref_f32, atol=1e-1, rtol=1e-1), "mismatch vs f32 reference"

    print("KERNEL_OK")
</pallas_src>

<mosaic_0001>
module attributes {stable_mosaic.version = 11 : i64} {
  func.func @_fused_lstm_kernel(%arg0: memref<64x4xbf16, #tpu.memory_space<vmem>>, %arg1: memref<4x32xbf16, #tpu.memory_space<vmem>>, %arg2: memref<1x32xf32, #tpu.memory_space<vmem>>, %arg3: memref<8x128xf32, #tpu.memory_space<vmem>>, %arg4: memref<8x128xf32, #tpu.memory_space<vmem>>, %arg5: memref<32x128xbf16, #tpu.memory_space<vmem>>, %arg6: memref<32x128xbf16, #tpu.memory_space<vmem>>, %arg7: memref<1x128xf32, #tpu.memory_space<vmem>>, %arg8: memref<32x128xbf16, #tpu.memory_space<vmem>>, %arg9: memref<32x128xbf16, #tpu.memory_space<vmem>>, %arg10: memref<1x128xf32, #tpu.memory_space<vmem>>, %arg11: memref<32x128xbf16, #tpu.memory_space<vmem>>, %arg12: memref<1x128xf32, #tpu.memory_space<vmem>>, %arg13: memref<64x128xf32, #tpu.memory_space<vmem>>, %arg14: memref<64x32xf32, #tpu.memory_space<vmem>>, %arg15: memref<64x128xf32, #tpu.memory_space<vmem>>) attributes {dimension_semantics = [], scalar_prefetch = 0 : i64, scratch_operands = 2 : i64, tpu.core_type = #tpu.core_type<tc>} {
    %c0 = arith.constant 0 : index
    %c0_0 = arith.constant 0 : index
    %0 = vector.load %arg0[%c0, %c0_0] : memref<64x4xbf16, #tpu.memory_space<vmem>>, vector<64x4xbf16>
    %c0_1 = arith.constant 0 : index
    %c0_2 = arith.constant 0 : index
    %1 = vector.load %arg1[%c0_1, %c0_2] : memref<4x32xbf16, #tpu.memory_space<vmem>>, vector<4x32xbf16>
    %cst = arith.constant dense<0.000000e+00> : vector<64x32xf32>
    %2 = tpu.matmul %0, %1, %cst {dimension_numbers = #tpu.dot_dimension_numbers<[1], [0], [0], [1], [0, 0, 1, 1], [], []>} : vector<64x4xbf16>, vector<4x32xbf16>, vector<64x32xf32> -> vector<64x32xf32>
    %c0_3 = arith.constant 0 : index
    %c0_4 = arith.constant 0 : index
    %3 = vector.load %arg2[%c0_3, %c0_4] : memref<1x32xf32, #tpu.memory_space<vmem>>, vector<1x32xf32>
    %4 = vector.broadcast %3 : vector<1x32xf32> to vector<64x32xf32>
    %5 = arith.addf %2, %4 : vector<64x32xf32>
    %c0_5 = arith.constant 0 : index
    %c0_6 = arith.constant 0 : index
    %6 = vector.load %arg14[%c0_5, %c0_6] : memref<64x32xf32, #tpu.memory_space<vmem>>, vector<64x32xf32>
    tpu.vector_store %arg14[%c0_5, %c0_6], %5 {strides = array<i32>} : memref<64x32xf32, #tpu.memory_space<vmem>>, vector<64x32xf32>,
    %c0_7 = arith.constant 0 : index
    %c0_8 = arith.constant 0 : index
    %7 = vector.load %arg3[%c0_7, %c0_8] : memref<8x128xf32, #tpu.memory_space<vmem>>, vector<8x128xf32>
    %c0_9 = arith.constant 0 : index
    %c0_10 = arith.constant 0 : index
    %8 = vector.load %arg4[%c0_9, %c0_10] : memref<8x128xf32, #tpu.memory_space<vmem>>, vector<8x128xf32>
    %c0_11 = arith.constant 0 : index
    %c0_12 = arith.constant 0 : index
    %9 = vector.load %arg5[%c0_11, %c0_12] : memref<32x128xbf16, #tpu.memory_space<vmem>>, vector<32x128xbf16>
    %c0_13 = arith.constant 0 : index
    %c0_14 = arith.constant 0 : index
    %10 = vector.load %arg6[%c0_13, %c0_14] : memref<32x128xbf16, #tpu.memory_space<vmem>>, vector<32x128xbf16>
    %c0_15 = arith.constant 0 : index
    %c0_16 = arith.constant 0 : index
    %11 = vector.load %arg7[%c0_15, %c0_16] : memref<1x128xf32, #tpu.memory_space<vmem>>, vector<1x128xf32>
    %c0_17 = arith.constant 0 : index
    %c0_18 = arith.constant 0 : index
    %12 = vector.load %arg14[%c0_17, %c0_18] : memref<64x32xf32, #tpu.memory_space<vmem>>, vector<64x32xf32>
    %13 = arith.truncf %12 : vector<64x32xf32> to vector<64x32xbf16>
    %cst_19 = arith.constant dense<0.000000e+00> : vector<64x128xf32>
    %14 = tpu.matmul %13, %9, %cst_19 {dimension_numbers = #tpu.dot_dimension_numbers<[1], [0], [0], [1], [0, 0, 1, 1], [], []>} : vector<64x32xbf16>, vector<32x128xbf16>, vector<64x128xf32> -> vector<64x128xf32>
    %15 = vector.broadcast %11 : vector<1x128xf32> to vector<64x128xf32>
    %16 = arith.addf %14, %15 : vector<64x128xf32>
    %c0_20 = arith.constant 0 : index
    %c0_21 = arith.constant 0 : index
    %17 = vector.load %arg15[%c0_20, %c0_21] : memref<64x128xf32, #tpu.memory_space<vmem>>, vector<64x128xf32>
    tpu.vector_store %arg15[%c0_20, %c0_21], %16 {strides = array<i32>} : memref<64x128xf32, #tpu.memory_space<vmem>>, vector<64x128xf32>,
    %cst_22 = arith.constant 0.000000e+00 : f32
    %18 = vector.broadcast %cst_22 : f32 to vector<8x32xf32>
    %cst_23 = arith.constant 0.000000e+00 : f32
    %19 = vector.broadcast %cst_23 : f32 to vector<8x32xf32>
    %c0_24 = arith.constant 0 : index
    %c0_25 = arith.constant 0 : index
    %20 = vector.load %arg15[%c0_24, %c0_25] : memref<64x128xf32, #tpu.memory_space<vmem>>, vector<8x128xf32>
    %21 = arith.truncf %18 : vector<8x32xf32> to vector<8x32xbf16>
    %cst_26 = arith.constant dense<0.000000e+00> : vector<8x128xf32>
    %22 = tpu.matmul %21, %10, %cst_26 {dimension_numbers = #tpu.dot_dimension_numbers<[1], [0], [0], [1], [0, 0, 1, 1], [], []>} : vector<8x32xbf16>, vector<32x128xbf16>, vector<8x128xf32> -> vector<8x128xf32>
    %23 = arith.addf %20, %22 : vector<8x128xf32>
    %24 = math.tanh %23 : vector<8x128xf32>
    %25 = arith.mulf %7, %24 : vector<8x128xf32>
    %26 = arith.addf %25, %8 : vector<8x128xf32>
    %27 = vector.extract_strided_slice %26 {offsets = [0, 32], sizes = [8, 32], strides = [1, 1]} : vector<8x128xf32> to vector<8x32xf32>
    %28 = arith.mulf %27, %19 : vector<8x32xf32>
    %29 = vector.extract_strided_slice %26 {offsets = [0, 0], sizes = [8, 32], strides = [1, 1]} : vector<8x128xf32> to vector<8x32xf32>
    %30 = vector.extract_strided_slice %26 {offsets = [0, 64], sizes = [8, 32], strides = [1, 1]} : vector<8x128xf32> to vector<8x32xf32>
    %31 = arith.mulf %29, %30 : vector<8x32xf32>
    %32 = arith.addf %28, %31 : vector<8x32xf32>
    %33 = vector.extract_strided_slice %26 {offsets = [0, 96], sizes = [8, 32], strides = [1, 1]} : vector<8x128xf32> to vector<8x32xf32>
    %34 = math.tanh %32 : vector<8x32xf32>
    %35 = arith.mulf %33, %34 : vector<8x32xf32>
    %c0_27 = arith.constant 0 : index
    %c0_28 = arith.constant 0 : index
    %36 = vector.load %arg14[%c0_27, %c0_28] : memref<64x32xf32, #tpu.memory_space<vmem>>, vector<8x32xf32>
    tpu.vector_store %arg14[%c0_27, %c0_28], %35 {strides = array<i32>} : memref<64x32xf32, #tpu.memory_space<vmem>>, vector<8x32xf32>,
    %c8 = arith.constant 8 : index
    %c0_29 = arith.constant 0 : index
    %37 = vector.load %arg15[%c8, %c0_29] : memref<64x128xf32, #tpu.memory_space<vmem>>, vector<8x128xf32>
    %38 = arith.truncf %35 : vector<8x32xf32> to vector<8x32xbf16>
    %cst_30 = arith.constant dense<0.000000e+00> : vector<8x128xf32>
    %39 = tpu.matmul %38, %10, %cst_30 {dimension_numbers = #tpu.dot_dimension_numbers<[1], [0], [0], [1], [0, 0, 1, 1], [], []>} : vector<8x32xbf16>, vector<32x128xbf16>, vector<8x128xf32> -> vector<8x128xf32>
    %40 = arith.addf %37, %39 : vector<8x128xf32>
    %41 = math.tanh %40 : vector<8x128xf32>
    %42 = arith.mulf %7, %41 : vector<8x128xf32>
    %43 = arith.addf %42, %8 : vector<8x128xf32>
    %44 = vector.extract_strided_slice %43 {offsets = [0, 32], sizes = [8, 32], strides = [1, 1]} : vector<8x128xf32> to vector<8x32xf32>
    %45 = arith.mulf %44, %32 : vector<8x32xf32>
    %46 = vector.extract_strided_slice %43 {offsets = [0, 0], sizes = [8, 32], strides = [1, 1]} : vector<8x128xf32> to vector<8x32xf32>
    %47 = vector.extract_strided_slice %43 {offsets = [0, 64], sizes = [8, 32], strides = [1, 1]} : vector<8x128xf32> to vector<8x32xf32>
    %48 = arith.mulf %46, %47 : vector<8x32xf32>
    %49 = arith.addf %45, %48 : vector<8x32xf32>
    %50 = vector.extract_strided_slice %43 {offsets = [0, 96], sizes = [8, 32], strides = [1, 1]} : vector<8x128xf32> to vector<8x32xf32>
    %51 = math.tanh %49 : vector<8x32xf32>
    %52 = arith.mulf %50, %51 : vector<8x32xf32>
    %c8_31 = arith.constant 8 : index
    %c0_32 = arith.constant 0 : index
    %53 = vector.load %arg14[%c8_31, %c0_32] : memref<64x32xf32, #tpu.memory_space<vmem>>, vector<8x32xf32>
    tpu.vector_store %arg14[%c8_31, %c0_32], %52 {strides = array<i32>} : memref<64x32xf32, #tpu.memory_space<vmem>>, vector<8x32xf32>,
    %c16 = arith.constant 16 : index
    %c0_33 = arith.constant 0 : index
    %54 = vector.load %arg15[%c16, %c0_33] : memref<64x128xf32, #tpu.memory_space<vmem>>, vector<8x128xf32>
    %55 = arith.truncf %52 : vector<8x32xf32> to vector<8x32xbf16>
    %cst_34 = arith.constant dense<0.000000e+00> : vector<8x128xf32>
    %56 = tpu.matmul %55, %10, %cst_34 {dimension_numbers = #tpu.dot_dimension_numbers<[1], [0], [0], [1], [0, 0, 1, 1], [], []>} : vector<8x32xbf16>, vector<32x128xbf16>, vector<8x128xf32> -> vector<8x128xf32>
    %57 = arith.addf %54, %56 : vector<8x128xf32>
    %58 = math.tanh %57 : vector<8x128xf32>
    %59 = arith.mulf %7, %58 : vector<8x128xf32>
    %60 = arith.addf %59, %8 : vector<8x128xf32>
    %61 = vector.extract_strided_slice %60 {offsets = [0, 32], sizes = [8, 32], strides = [1, 1]} : vector<8x128xf32> to vector<8x32xf32>
    %62 = arith.mulf %61, %49 : vector<8x32xf32>
    %63 = vector.extract_strided_slice %60 {offsets = [0, 0], sizes = [8, 32], strides = [1, 1]} : vector<8x128xf32> to vector<8x32xf32>
    %64 = vector.extract_strided_slice %60 {offsets = [0, 64], sizes = [8, 32], strides = [1, 1]} : vector<8x128xf32> to vector<8x32xf32>
    %65 = arith.mulf %63, %64 : vector<8x32xf32>
    %66 = arith.addf %62, %65 : vector<8x32xf32>
    %67 = vector.extract_strided_slice %60 {offsets = [0, 96], sizes = [8, 32], strides = [1, 1]} : vector<8x128xf32> to vector<8x32xf32>
    %68 = math.tanh %66 : vector<8x32xf32>
    %69 = arith.mulf %67, %68 : vector<8x32xf32>
    %c16_35 = arith.constant 16 : index
    %c0_36 = arith.constant 0 : index
    %70 = vector.load %arg14[%c16_35, %c0_36] : memref<64x32xf32, #tpu.memory_space<vmem>>, vector<8x32xf32>
    tpu.vector_store %arg14[%c16_35, %c0_36], %69 {strides = array<i32>} : memref<64x32xf32, #tpu.memory_space<vmem>>, vector<8x32xf32>,
    %c24 = arith.constant 24 : index
    %c0_37 = arith.constant 0 : index
    %71 = vector.load %arg15[%c24, %c0_37] : memref<64x128xf32, #tpu.memory_space<vmem>>, vector<8x128xf32>
    %72 = arith.truncf %69 : vector<8x32xf32> to vector<8x32xbf16>
    %cst_38 = arith.constant dense<0.000000e+00> : vector<8x128xf32>
    %73 = tpu.matmul %72, %10, %cst_38 {dimension_numbers = #tpu.dot_dimension_numbers<[1], [0], [0], [1], [0, 0, 1, 1], [], []>} : vector<8x32xbf16>, vector<32x128xbf16>, vector<8x128xf32> -> vector<8x128xf32>
    %74 = arith.addf %71, %73 : vector<8x128xf32>
    %75 = math.tanh %74 : vector<8x128xf32>
    %76 = arith.mulf %7, %75 : vector<8x128xf32>
    %77 = arith.addf %76, %8 : vector<8x128xf32>
    %78 = vector.extract_strided_slice %77 {offsets = [0, 32], sizes = [8, 32], strides = [1, 1]} : vector<8x128xf32> to vector<8x32xf32>
    %79 = arith.mulf %78, %66 : vector<8x32xf32>
    %80 = vector.extract_strided_slice %77 {offsets = [0, 0], sizes = [8, 32], strides = [1, 1]} : vector<8x128xf32> to vector<8x32xf32>
    %81 = vector.extract_strided_slice %77 {offsets = [0, 64], sizes = [8, 32], strides = [1, 1]} : vector<8x128xf32> to vector<8x32xf32>
    %82 = arith.mulf %80, %81 : vector<8x32xf32>
    %83 = arith.addf %79, %82 : vector<8x32xf32>
    %84 = vector.extract_strided_slice %77 {offsets = [0, 96], sizes = [8, 32], strides = [1, 1]} : vector<8x128xf32> to vector<8x32xf32>
    %85 = math.tanh %83 : vector<8x32xf32>
    %86 = arith.mulf %84, %85 : vector<8x32xf32>
    %c24_39 = arith.constant 24 : index
    %c0_40 = arith.constant 0 : index
    %87 = vector.load %arg14[%c24_39, %c0_40] : memref<64x32xf32, #tpu.memory_space<vmem>>, vector<8x32xf32>
    tpu.vector_store %arg14[%c24_39, %c0_40], %86 {strides = array<i32>} : memref<64x32xf32, #tpu.memory_space<vmem>>, vector<8x32xf32>,
    %c32 = arith.constant 32 : index
    %c0_41 = arith.constant 0 : index
    %88 = vector.load %arg15[%c32, %c0_41] : memref<64x128xf32, #tpu.memory_space<vmem>>, vector<8x128xf32>
    %89 = arith.truncf %86 : vector<8x32xf32> to vector<8x32xbf16>
    %cst_42 = arith.constant dense<0.000000e+00> : vector<8x128xf32>
    %90 = tpu.matmul %89, %10, %cst_42 {dimension_numbers = #tpu.dot_dimension_numbers<[1], [0], [0], [1], [0, 0, 1, 1], [], []>} : vector<8x32xbf16>, vector<32x128xbf16>, vector<8x128xf32> -> vector<8x128xf32>
    %91 = arith.addf %88, %90 : vector<8x128xf32>
    %92 = math.tanh %91 : vector<8x128xf32>
    %93 = arith.mulf %7, %92 : vector<8x128xf32>
    %94 = arith.addf %93, %8 : vector<8x128xf32>
    %95 = vector.extract_strided_slice %94 {offsets = [0, 32], sizes = [8, 32], strides = [1, 1]} : vector<8x128xf32> to vector<8x32xf32>
    %96 = arith.mulf %95, %83 : vector<8x32xf32>
    %97 = vector.extract_strided_slice %94 {offsets = [0, 0], sizes = [8, 32], strides = [1, 1]} : vector<8x128xf32> to vector<8x32xf32>
    %98 = vector.extract_strided_slice %94 {offsets = [0, 64], sizes = [8, 32], strides = [1, 1]} : vector<8x128xf32> to vector<8x32xf32>
    %99 = arith.mulf %97, %98 : vector<8x32xf32>
    %100 = arith.addf %96, %99 : vector<8x32xf32>
    %101 = vector.extract_strided_slice %94 {offsets = [0, 96], sizes = [8, 32], strides = [1, 1]} : vector<8x128xf32> to vector<8x32xf32>
    %102 = math.tanh %100 : vector<8x32xf32>
    %103 = arith.mulf %101, %102 : vector<8x32xf32>
    %c32_43 = arith.constant 32 : index
    %c0_44 = arith.constant 0 : index
    %104 = vector.load %arg14[%c32_43, %c0_44] : memref<64x32xf32, #tpu.memory_space<vmem>>, vector<8x32xf32>
    tpu.vector_store %arg14[%c32_43, %c0_44], %103 {strides = array<i32>} : memref<64x32xf32, #tpu.memory_space<vmem>>, vector<8x32xf32>,
    %c40 = arith.constant 40 : index
    %c0_45 = arith.constant 0 : index
    %105 = vector.load %arg15[%c40, %c0_45] : memref<64x128xf32, #tpu.memory_space<vmem>>, vector<8x128xf32>
    %106 = arith.truncf %103 : vector<8x32xf32> to vector<8x32xbf16>
    %cst_46 = arith.constant dense<0.000000e+00> : vector<8x128xf32>
    %107 = tpu.matmul %106, %10, %cst_46 {dimension_numbers = #tpu.dot_dimension_numbers<[1], [0], [0], [1], [0, 0, 1, 1], [], []>} : vector<8x32xbf16>, vector<32x128xbf16>, vector<8x128xf32> -> vector<8x128xf32>
    %108 = arith.addf %105, %107 : vector<8x128xf32>
    %109 = math.tanh %108 : vector<8x128xf32>
    %110 = arith.mulf %7, %109 : vector<8x128xf32>
    %111 = arith.addf %110, %8 : vector<8x128xf32>
    %112 = vector.extract_strided_slice %111 {offsets = [0, 32], sizes = [8, 32], strides = [1, 1]} : vector<8x128xf32> to vector<8x32xf32>
    %113 = arith.mulf %112, %100 : vector<8x32xf32>
    %114 = vector.extract_strided_slice %111 {offsets = [0, 0], sizes = [8, 32], strides = [1, 1]} : vector<8x128xf32> to vector<8x32xf32>
    %115 = vector.extract_strided_slice %111 {offsets = [0, 64], sizes = [8, 32], strides = [1, 1]} : vector<8x128xf32> to vector<8x32xf32>
    %116 = arith.mulf %114, %115 : vector<8x32xf32>
    %117 = arith.addf %113, %116 : vector<8x32xf32>
    %118 = vector.extract_strided_slice %111 {offsets = [0, 96], sizes = [8, 32], strides = [1, 1]} : vector<8x128xf32> to vector<8x32xf32>
    %119 = math.tanh %117 : vector<8x32xf32>
    %120 = arith.mulf %118, %119 : vector<8x32xf32>
    %c40_47 = arith.constant 40 : index
    %c0_48 = arith.constant 0 : index
    %121 = vector.load %arg14[%c40_47, %c0_48] : memref<64x32xf32, #tpu.memory_space<vmem>>, vector<8x32xf32>
    tpu.vector_store %arg14[%c40_47, %c0_48], %120 {strides = array<i32>} : memref<64x32xf32, #tpu.memory_space<vmem>>, vector<8x32xf32>,
    %c48 = arith.constant 48 : index
    %c0_49 = arith.constant 0 : index
    %122 = vector.load %arg15[%c48, %c0_49] : memref<64x128xf32, #tpu.memory_space<vmem>>, vector<8x128xf32>
    %123 = arith.truncf %120 : vector<8x32xf32> to vector<8x32xbf16>
    %cst_50 = arith.constant dense<0.000000e+00> : vector<8x128xf32>
    %124 = tpu.matmul %123, %10, %cst_50 {dimension_numbers = #tpu.dot_dimension_numbers<[1], [0], [0], [1], [0, 0, 1, 1], [], []>} : vector<8x32xbf16>, vector<32x128xbf16>, vector<8x128xf32> -> vector<8x128xf32>
    %125 = arith.addf %122, %124 : vector<8x128xf32>
    %126 = math.tanh %125 : vector<8x128xf32>
    %127 = arith.mulf %7, %126 : vector<8x128xf32>
    %128 = arith.addf %127, %8 : vector<8x128xf32>
    %129 = vector.extract_strided_slice %128 {offsets = [0, 32], sizes = [8, 32], strides = [1, 1]} : vector<8x128xf32> to vector<8x32xf32>
    %130 = arith.mulf %129, %117 : vector<8x32xf32>
    %131 = vector.extract_strided_slice %128 {offsets = [0, 0], sizes = [8, 32], strides = [1, 1]} : vector<8x128xf32> to vector<8x32xf32>
    %132 = vector.extract_strided_slice %128 {offsets = [0, 64], sizes = [8, 32], strides = [1, 1]} : vector<8x128xf32> to vector<8x32xf32>
    %133 = arith.mulf %131, %132 : vector<8x32xf32>
    %134 = arith.addf %130, %133 : vector<8x32xf32>
    %135 = vector.extract_strided_slice %128 {offsets = [0, 96], sizes = [8, 32], strides = [1, 1]} : vector<8x128xf32> to vector<8x32xf32>
    %136 = math.tanh %134 : vector<8x32xf32>
    %137 = arith.mulf %135, %136 : vector<8x32xf32>
    %c48_51 = arith.constant 48 : index
    %c0_52 = arith.constant 0 : index
    %138 = vector.load %arg14[%c48_51, %c0_52] : memref<64x32xf32, #tpu.memory_space<vmem>>, vector<8x32xf32>
    tpu.vector_store %arg14[%c48_51, %c0_52], %137 {strides = array<i32>} : memref<64x32xf32, #tpu.memory_space<vmem>>, vector<8x32xf32>,
    %c56 = arith.constant 56 : index
    %c0_53 = arith.constant 0 : index
    %139 = vector.load %arg15[%c56, %c0_53] : memref<64x128xf32, #tpu.memory_space<vmem>>, vector<8x128xf32>
    %140 = arith.truncf %137 : vector<8x32xf32> to vector<8x32xbf16>
    %cst_54 = arith.constant dense<0.000000e+00> : vector<8x128xf32>
    %141 = tpu.matmul %140, %10, %cst_54 {dimension_numbers = #tpu.dot_dimension_numbers<[1], [0], [0], [1], [0, 0, 1, 1], [], []>} : vector<8x32xbf16>, vector<32x128xbf16>, vector<8x128xf32> -> vector<8x128xf32>
    %142 = arith.addf %139, %141 : vector<8x128xf32>
    %143 = math.tanh %142 : vector<8x128xf32>
    %144 = arith.mulf %7, %143 : vector<8x128xf32>
    %145 = arith.addf %144, %8 : vector<8x128xf32>
    %146 = vector.extract_strided_slice %145 {offsets = [0, 32], sizes = [8, 32], strides = [1, 1]} : vector<8x128xf32> to vector<8x32xf32>
    %147 = arith.mulf %146, %134 : vector<8x32xf32>
    %148 = vector.extract_strided_slice %145 {offsets = [0, 0], sizes = [8, 32], strides = [1, 1]} : vector<8x128xf32> to vector<8x32xf32>
    %149 = vector.extract_strided_slice %145 {offsets = [0, 64], sizes = [8, 32], strides = [1, 1]} : vector<8x128xf32> to vector<8x32xf32>
    %150 = arith.mulf %148, %149 : vector<8x32xf32>
    %151 = arith.addf %147, %150 : vector<8x32xf32>
    %152 = vector.extract_strided_slice %145 {offsets = [0, 96], sizes = [8, 32], strides = [1, 1]} : vector<8x128xf32> to vector<8x32xf32>
    %153 = math.tanh %151 : vector<8x32xf32>
    %154 = arith.mulf %152, %153 : vector<8x32xf32>
    %c56_55 = arith.constant 56 : index
    %c0_56 = arith.constant 0 : index
    %155 = vector.load %arg14[%c56_55, %c0_56] : memref<64x32xf32, #tpu.memory_space<vmem>>, vector<8x32xf32>
    tpu.vector_store %arg14[%c56_55, %c0_56], %154 {strides = array<i32>} : memref<64x32xf32, #tpu.memory_space<vmem>>, vector<8x32xf32>,
    %c0_57 = arith.constant 0 : index
    %c0_58 = arith.constant 0 : index
    %156 = vector.load %arg8[%c0_57, %c0_58] : memref<32x128xbf16, #tpu.memory_space<vmem>>, vector<32x128xbf16>
    %c0_59 = arith.constant 0 : index
    %c0_60 = arith.constant 0 : index
    %157 = vector.load %arg9[%c0_59, %c0_60] : memref<32x128xbf16, #tpu.memory_space<vmem>>, vector<32x128xbf16>
    %c0_61 = arith.constant 0 : index
    %c0_62 = arith.constant 0 : index
    %158 = vector.load %arg10[%c0_61, %c0_62] : memref<1x128xf32, #tpu.memory_space<vmem>>, vector<1x128xf32>
    %c0_63 = arith.constant 0 : index
    %c0_64 = arith.constant 0 : index
    %159 = vector.load %arg14[%c0_63, %c0_64] : memref<64x32xf32, #tpu.memory_space<vmem>>, vector<64x32xf32>
    %160 = arith.truncf %159 : vector<64x32xf32> to vector<64x32xbf16>
    %cst_65 = arith.constant dense<0.000000e+00> : vector<64x128xf32>
    %161 = tpu.matmul %160, %156, %cst_65 {dimension_numbers = #tpu.dot_dimension_numbers<[1], [0], [0], [1], [0, 0, 1, 1], [], []>} : vector<64x32xbf16>, vector<32x128xbf16>, vector<64x128xf32> -> vector<64x128xf32>
    %162 = vector.broadcast %158 : vector<1x128xf32> to vector<64x128xf32>
    %163 = arith.addf %161, %162 : vector<64x128xf32>
    %c0_66 = arith.constant 0 : index
    %c0_67 = arith.constant 0 : index
    %164 = vector.load %arg15[%c0_66, %c0_67] : memref<64x128xf32, #tpu.memory_space<vmem>>, vector<64x128xf32>
    tpu.vector_store %arg15[%c0_66, %c0_67], %163 {strides = array<i32>} : memref<64x128xf32, #tpu.memory_space<vmem>>, vector<64x128xf32>,
    %cst_68 = arith.constant 0.000000e+00 : f32
    %165 = vector.broadcast %cst_68 : f32 to vector<8x32xf32>
    %cst_69 = arith.constant 0.000000e+00 : f32
    %166 = vector.broadcast %cst_69 : f32 to vector<8x32xf32>
    %c0_70 = arith.constant 0 : index
    %c0_71 = arith.constant 0 : index
    %167 = vector.load %arg15[%c0_70, %c0_71] : memref<64x128xf32, #tpu.memory_space<vmem>>, vector<8x128xf32>
    %168 = arith.truncf %165 : vector<8x32xf32> to vector<8x32xbf16>
    %cst_72 = arith.constant dense<0.000000e+00> : vector<8x128xf32>
    %169 = tpu.matmul %168, %157, %cst_72 {dimension_numbers = #tpu.dot_dimension_numbers<[1], [0], [0], [1], [0, 0, 1, 1], [], []>} : vector<8x32xbf16>, vector<32x128xbf16>, vector<8x128xf32> -> vector<8x128xf32>
    %170 = arith.addf %167, %169 : vector<8x128xf32>
    %171 = math.tanh %170 : vector<8x128xf32>
    %172 = arith.mulf %7, %171 : vector<8x128xf32>
    %173 = arith.addf %172, %8 : vector<8x128xf32>
    %174 = vector.extract_strided_slice %173 {offsets = [0, 32], sizes = [8, 32], strides = [1, 1]} : vector<8x128xf32> to vector<8x32xf32>
    %175 = arith.mulf %174, %166 : vector<8x32xf32>
    %176 = vector.extract_strided_slice %173 {offsets = [0, 0], sizes = [8, 32], strides = [1, 1]} : vector<8x128xf32> to vector<8x32xf32>
    %177 = vector.extract_strided_slice %173 {offsets = [0, 64], sizes = [8, 32], strides = [1, 1]} : vector<8x128xf32> to vector<8x32xf32>
    %178 = arith.mulf %176, %177 : vector<8x32xf32>
    %179 = arith.addf %175, %178 : vector<8x32xf32>
    %180 = vector.extract_strided_slice %173 {offsets = [0, 96], sizes = [8, 32], strides = [1, 1]} : vector<8x128xf32> to vector<8x32xf32>
    %181 = math.tanh %179 : vector<8x32xf32>
    %182 = arith.mulf %180, %181 : vector<8x32xf32>
    %c0_73 = arith.constant 0 : index
    %c0_74 = arith.constant 0 : index
    %183 = vector.load %arg14[%c0_73, %c0_74] : memref<64x32xf32, #tpu.memory_space<vmem>>, vector<8x32xf32>
    tpu.vector_store %arg14[%c0_73, %c0_74], %182 {strides = array<i32>} : memref<64x32xf32, #tpu.memory_space<vmem>>, vector<8x32xf32>,
    %c8_75 = arith.constant 8 : index
    %c0_76 = arith.constant 0 : index
    %184 = vector.load %arg15[%c8_75, %c0_76] : memref<64x128xf32, #tpu.memory_space<vmem>>, vector<8x128xf32>
    %185 = arith.truncf %182 : vector<8x32xf32> to vector<8x32xbf16>
    %cst_77 = arith.constant dense<0.000000e+00> : vector<8x128xf32>
    %186 = tpu.matmul %185, %157, %cst_77 {dimension_numbers = #tpu.dot_dimension_numbers<[1], [0], [0], [1], [0, 0, 1, 1], [], []>} : vector<8x32xbf16>, vector<32x128xbf16>, vector<8x128xf32> -> vector<8x128xf32>
    %187 = arith.addf %184, %186 : vector<8x128xf32>
    %188 = math.tanh %187 : vector<8x128xf32>
    %189 = arith.mulf %7, %188 : vector<8x128xf32>
    %190 = arith.addf %189, %8 : vector<8x128xf32>
    %191 = vector.extract_strided_slice %190 {offsets = [0, 32], sizes = [8, 32], strides = [1, 1]} : vector<8x128xf32> to vector<8x32xf32>
    %192 = arith.mulf %191, %179 : vector<8x32xf32>
    %193 = vector.extract_strided_slice %190 {offsets = [0, 0], sizes = [8, 32], strides = [1, 1]} : vector<8x128xf32> to vector<8x32xf32>
    %194 = vector.extract_strided_slice %190 {offsets = [0, 64], sizes = [8, 32], strides = [1, 1]} : vector<8x128xf32> to vector<8x32xf32>
    %195 = arith.mulf %193, %194 : vector<8x32xf32>
    %196 = arith.addf %192, %195 : vector<8x32xf32>
    %197 = vector.extract_strided_slice %190 {offsets = [0, 96], sizes = [8, 32], strides = [1, 1]} : vector<8x128xf32> to vector<8x32xf32>
    %198 = math.tanh %196 : vector<8x32xf32>
    %199 = arith.mulf %197, %198 : vector<8x32xf32>
    %c8_78 = arith.constant 8 : index
    %c0_79 = arith.constant 0 : index
    %200 = vector.load %arg14[%c8_78, %c0_79] : memref<64x32xf32, #tpu.memory_space<vmem>>, vector<8x32xf32>
    tpu.vector_store %arg14[%c8_78, %c0_79], %199 {strides = array<i32>} : memref<64x32xf32, #tpu.memory_space<vmem>>, vector<8x32xf32>,
    %c16_80 = arith.constant 16 : index
    %c0_81 = arith.constant 0 : index
    %201 = vector.load %arg15[%c16_80, %c0_81] : memref<64x128xf32, #tpu.memory_space<vmem>>, vector<8x128xf32>
    %202 = arith.truncf %199 : vector<8x32xf32> to vector<8x32xbf16>
    %cst_82 = arith.constant dense<0.000000e+00> : vector<8x128xf32>
    %203 = tpu.matmul %202, %157, %cst_82 {dimension_numbers = #tpu.dot_dimension_numbers<[1], [0], [0], [1], [0, 0, 1, 1], [], []>} : vector<8x32xbf16>, vector<32x128xbf16>, vector<8x128xf32> -> vector<8x128xf32>
    %204 = arith.addf %201, %203 : vector<8x128xf32>
    %205 = math.tanh %204 : vector<8x128xf32>
    %206 = arith.mulf %7, %205 : vector<8x128xf32>
    %207 = arith.addf %206, %8 : vector<8x128xf32>
    %208 = vector.extract_strided_slice %207 {offsets = [0, 32], sizes = [8, 32], strides = [1, 1]} : vector<8x128xf32> to vector<8x32xf32>
    %209 = arith.mulf %208, %196 : vector<8x32xf32>
    %210 = vector.extract_strided_slice %207 {offsets = [0, 0], sizes = [8, 32], strides = [1, 1]} : vector<8x128xf32> to vector<8x32xf32>
    %211 = vector.extract_strided_slice %207 {offsets = [0, 64], sizes = [8, 32], strides = [1, 1]} : vector<8x128xf32> to vector<8x32xf32>
    %212 = arith.mulf %210, %211 : vector<8x32xf32>
    %213 = arith.addf %209, %212 : vector<8x32xf32>
    %214 = vector.extract_strided_slice %207 {offsets = [0, 96], sizes = [8, 32], strides = [1, 1]} : vector<8x128xf32> to vector<8x32xf32>
    %215 = math.tanh %213 : vector<8x32xf32>
    %216 = arith.mulf %214, %215 : vector<8x32xf32>
    %c16_83 = arith.constant 16 : index
    %c0_84 = arith.constant 0 : index
    %217 = vector.load %arg14[%c16_83, %c0_84] : memref<64x32xf32, #tpu.memory_space<vmem>>, vector<8x32xf32>
    tpu.vector_store %arg14[%c16_83, %c0_84], %216 {strides = array<i32>} : memref<64x32xf32, #tpu.memory_space<vmem>>, vector<8x32xf32>,
    %c24_85 = arith.constant 24 : index
    %c0_86 = arith.constant 0 : index
    %218 = vector.load %arg15[%c24_85, %c0_86] : memref<64x128xf32, #tpu.memory_space<vmem>>, vector<8x128xf32>
    %219 = arith.truncf %216 : vector<8x32xf32> to vector<8x32xbf16>
    %cst_87 = arith.constant dense<0.000000e+00> : vector<8x128xf32>
    %220 = tpu.matmul %219, %157, %cst_87 {dimension_numbers = #tpu.dot_dimension_numbers<[1], [0], [0], [1], [0, 0, 1, 1], [], []>} : vector<8x32xbf16>, vector<32x128xbf16>, vector<8x128xf32> -> vector<8x128xf32>
    %221 = arith.addf %218, %220 : vector<8x128xf32>
    %222 = math.tanh %221 : vector<8x128xf32>
    %223 = arith.mulf %7, %222 : vector<8x128xf32>
    %224 = arith.addf %223, %8 : vector<8x128xf32>
    %225 = vector.extract_strided_slice %224 {offsets = [0, 32], sizes = [8, 32], strides = [1, 1]} : vector<8x128xf32> to vector<8x32xf32>
    %226 = arith.mulf %225, %213 : vector<8x32xf32>
    %227 = vector.extract_strided_slice %224 {offsets = [0, 0], sizes = [8, 32], strides = [1, 1]} : vector<8x128xf32> to vector<8x32xf32>
    %228 = vector.extract_strided_slice %224 {offsets = [0, 64], sizes = [8, 32], strides = [1, 1]} : vector<8x128xf32> to vector<8x32xf32>
    %229 = arith.mulf %227, %228 : vector<8x32xf32>
    %230 = arith.addf %226, %229 : vector<8x32xf32>
    %231 = vector.extract_strided_slice %224 {offsets = [0, 96], sizes = [8, 32], strides = [1, 1]} : vector<8x128xf32> to vector<8x32xf32>
    %232 = math.tanh %230 : vector<8x32xf32>
    %233 = arith.mulf %231, %232 : vector<8x32xf32>
    %c24_88 = arith.constant 24 : index
    %c0_89 = arith.constant 0 : index
    %234 = vector.load %arg14[%c24_88, %c0_89] : memref<64x32xf32, #tpu.memory_space<vmem>>, vector<8x32xf32>
    tpu.vector_store %arg14[%c24_88, %c0_89], %233 {strides = array<i32>} : memref<64x32xf32, #tpu.memory_space<vmem>>, vector<8x32xf32>,
    %c32_90 = arith.constant 32 : index
    %c0_91 = arith.constant 0 : index
    %235 = vector.load %arg15[%c32_90, %c0_91] : memref<64x128xf32, #tpu.memory_space<vmem>>, vector<8x128xf32>
    %236 = arith.truncf %233 : vector<8x32xf32> to vector<8x32xbf16>
    %cst_92 = arith.constant dense<0.000000e+00> : vector<8x128xf32>
    %237 = tpu.matmul %236, %157, %cst_92 {dimension_numbers = #tpu.dot_dimension_numbers<[1], [0], [0], [1], [0, 0, 1, 1], [], []>} : vector<8x32xbf16>, vector<32x128xbf16>, vector<8x128xf32> -> vector<8x128xf32>
    %238 = arith.addf %235, %237 : vector<8x128xf32>
    %239 = math.tanh %238 : vector<8x128xf32>
    %240 = arith.mulf %7, %239 : vector<8x128xf32>
    %241 = arith.addf %240, %8 : vector<8x128xf32>
    %242 = vector.extract_strided_slice %241 {offsets = [0, 32], sizes = [8, 32], strides = [1, 1]} : vector<8x128xf32> to vector<8x32xf32>
    %243 = arith.mulf %242, %230 : vector<8x32xf32>
    %244 = vector.extract_strided_slice %241 {offsets = [0, 0], sizes = [8, 32], strides = [1, 1]} : vector<8x128xf32> to vector<8x32xf32>
    %245 = vector.extract_strided_slice %241 {offsets = [0, 64], sizes = [8, 32], strides = [1, 1]} : vector<8x128xf32> to vector<8x32xf32>
    %246 = arith.mulf %244, %245 : vector<8x32xf32>
    %247 = arith.addf %243, %246 : vector<8x32xf32>
    %248 = vector.extract_strided_slice %241 {offsets = [0, 96], sizes = [8, 32], strides = [1, 1]} : vector<8x128xf32> to vector<8x32xf32>
    %249 = math.tanh %247 : vector<8x32xf32>
    %250 = arith.mulf %248, %249 : vector<8x32xf32>
    %c32_93 = arith.constant 32 : index
    %c0_94 = arith.constant 0 : index
    %251 = vector.load %arg14[%c32_93, %c0_94] : memref<64x32xf32, #tpu.memory_space<vmem>>, vector<8x32xf32>
    tpu.vector_store %arg14[%c32_93, %c0_94], %250 {strides = array<i32>} : memref<64x32xf32, #tpu.memory_space<vmem>>, vector<8x32xf32>,
    %c40_95 = arith.constant 40 : index
    %c0_96 = arith.constant 0 : index
    %252 = vector.load %arg15[%c40_95, %c0_96] : memref<64x128xf32, #tpu.memory_space<vmem>>, vector<8x128xf32>
    %253 = arith.truncf %250 : vector<8x32xf32> to vector<8x32xbf16>
    %cst_97 = arith.constant dense<0.000000e+00> : vector<8x128xf32>
    %254 = tpu.matmul %253, %157, %cst_97 {dimension_numbers = #tpu.dot_dimension_numbers<[1], [0], [0], [1], [0, 0, 1, 1], [], []>} : vector<8x32xbf16>, vector<32x128xbf16>, vector<8x128xf32> -> vector<8x128xf32>
    %255 = arith.addf %252, %254 : vector<8x128xf32>
    %256 = math.tanh %255 : vector<8x128xf32>
    %257 = arith.mulf %7, %256 : vector<8x128xf32>
    %258 = arith.addf %257, %8 : vector<8x128xf32>
    %259 = vector.extract_strided_slice %258 {offsets = [0, 32], sizes = [8, 32], strides = [1, 1]} : vector<8x128xf32> to vector<8x32xf32>
    %260 = arith.mulf %259, %247 : vector<8x32xf32>
    %261 = vector.extract_strided_slice %258 {offsets = [0, 0], sizes = [8, 32], strides = [1, 1]} : vector<8x128xf32> to vector<8x32xf32>
    %262 = vector.extract_strided_slice %258 {offsets = [0, 64], sizes = [8, 32], strides = [1, 1]} : vector<8x128xf32> to vector<8x32xf32>
    %263 = arith.mulf %261, %262 : vector<8x32xf32>
    %264 = arith.addf %260, %263 : vector<8x32xf32>
    %265 = vector.extract_strided_slice %258 {offsets = [0, 96], sizes = [8, 32], strides = [1, 1]} : vector<8x128xf32> to vector<8x32xf32>
    %266 = math.tanh %264 : vector<8x32xf32>
    %267 = arith.mulf %265, %266 : vector<8x32xf32>
    %c40_98 = arith.constant 40 : index
    %c0_99 = arith.constant 0 : index
    %268 = vector.load %arg14[%c40_98, %c0_99] : memref<64x32xf32, #tpu.memory_space<vmem>>, vector<8x32xf32>
    tpu.vector_store %arg14[%c40_98, %c0_99], %267 {strides = array<i32>} : memref<64x32xf32, #tpu.memory_space<vmem>>, vector<8x32xf32>,
    %c48_100 = arith.constant 48 : index
    %c0_101 = arith.constant 0 : index
    %269 = vector.load %arg15[%c48_100, %c0_101] : memref<64x128xf32, #tpu.memory_space<vmem>>, vector<8x128xf32>
    %270 = arith.truncf %267 : vector<8x32xf32> to vector<8x32xbf16>
    %cst_102 = arith.constant dense<0.000000e+00> : vector<8x128xf32>
    %271 = tpu.matmul %270, %157, %cst_102 {dimension_numbers = #tpu.dot_dimension_numbers<[1], [0], [0], [1], [0, 0, 1, 1], [], []>} : vector<8x32xbf16>, vector<32x128xbf16>, vector<8x128xf32> -> vector<8x128xf32>
    %272 = arith.addf %269, %271 : vector<8x128xf32>
    %273 = math.tanh %272 : vector<8x128xf32>
    %274 = arith.mulf %7, %273 : vector<8x128xf32>
    %275 = arith.addf %274, %8 : vector<8x128xf32>
    %276 = vector.extract_strided_slice %275 {offsets = [0, 32], sizes = [8, 32], strides = [1, 1]} : vector<8x128xf32> to vector<8x32xf32>
    %277 = arith.mulf %276, %264 : vector<8x32xf32>
    %278 = vector.extract_strided_slice %275 {offsets = [0, 0], sizes = [8, 32], strides = [1, 1]} : vector<8x128xf32> to vector<8x32xf32>
    %279 = vector.extract_strided_slice %275 {offsets = [0, 64], sizes = [8, 32], strides = [1, 1]} : vector<8x128xf32> to vector<8x32xf32>
    %280 = arith.mulf %278, %279 : vector<8x32xf32>
    %281 = arith.addf %277, %280 : vector<8x32xf32>
    %282 = vector.extract_strided_slice %275 {offsets = [0, 96], sizes = [8, 32], strides = [1, 1]} : vector<8x128xf32> to vector<8x32xf32>
    %283 = math.tanh %281 : vector<8x32xf32>
    %284 = arith.mulf %282, %283 : vector<8x32xf32>
    %c48_103 = arith.constant 48 : index
    %c0_104 = arith.constant 0 : index
    %285 = vector.load %arg14[%c48_103, %c0_104] : memref<64x32xf32, #tpu.memory_space<vmem>>, vector<8x32xf32>
    tpu.vector_store %arg14[%c48_103, %c0_104], %284 {strides = array<i32>} : memref<64x32xf32, #tpu.memory_space<vmem>>, vector<8x32xf32>,
    %c56_105 = arith.constant 56 : index
    %c0_106 = arith.constant 0 : index
    %286 = vector.load %arg15[%c56_105, %c0_106] : memref<64x128xf32, #tpu.memory_space<vmem>>, vector<8x128xf32>
    %287 = arith.truncf %284 : vector<8x32xf32> to vector<8x32xbf16>
    %cst_107 = arith.constant dense<0.000000e+00> : vector<8x128xf32>
    %288 = tpu.matmul %287, %157, %cst_107 {dimension_numbers = #tpu.dot_dimension_numbers<[1], [0], [0], [1], [0, 0, 1, 1], [], []>} : vector<8x32xbf16>, vector<32x128xbf16>, vector<8x128xf32> -> vector<8x128xf32>
    %289 = arith.addf %286, %288 : vector<8x128xf32>
    %290 = math.tanh %289 : vector<8x128xf32>
    %291 = arith.mulf %7, %290 : vector<8x128xf32>
    %292 = arith.addf %291, %8 : vector<8x128xf32>
    %293 = vector.extract_strided_slice %292 {offsets = [0, 32], sizes = [8, 32], strides = [1, 1]} : vector<8x128xf32> to vector<8x32xf32>
    %294 = arith.mulf %293, %281 : vector<8x32xf32>
    %295 = vector.extract_strided_slice %292 {offsets = [0, 0], sizes = [8, 32], strides = [1, 1]} : vector<8x128xf32> to vector<8x32xf32>
    %296 = vector.extract_strided_slice %292 {offsets = [0, 64], sizes = [8, 32], strides = [1, 1]} : vector<8x128xf32> to vector<8x32xf32>
    %297 = arith.mulf %295, %296 : vector<8x32xf32>
    %298 = arith.addf %294, %297 : vector<8x32xf32>
    %299 = vector.extract_strided_slice %292 {offsets = [0, 96], sizes = [8, 32], strides = [1, 1]} : vector<8x128xf32> to vector<8x32xf32>
    %300 = math.tanh %298 : vector<8x32xf32>
    %301 = arith.mulf %299, %300 : vector<8x32xf32>
    %c56_108 = arith.constant 56 : index
    %c0_109 = arith.constant 0 : index
    %302 = vector.load %arg14[%c56_108, %c0_109] : memref<64x32xf32, #tpu.memory_space<vmem>>, vector<8x32xf32>
    tpu.vector_store %arg14[%c56_108, %c0_109], %301 {strides = array<i32>} : memref<64x32xf32, #tpu.memory_space<vmem>>, vector<8x32xf32>,
    %c0_110 = arith.constant 0 : index
    %c0_111 = arith.constant 0 : index
    %303 = vector.load %arg14[%c0_110, %c0_111] : memref<64x32xf32, #tpu.memory_space<vmem>>, vector<64x32xf32>
    %304 = arith.truncf %303 : vector<64x32xf32> to vector<64x32xbf16>
    %c0_112 = arith.constant 0 : index
    %c0_113 = arith.constant 0 : index
    %305 = vector.load %arg11[%c0_112, %c0_113] : memref<32x128xbf16, #tpu.memory_space<vmem>>, vector<32x128xbf16>
    %cst_114 = arith.constant dense<0.000000e+00> : vector<64x128xf32>
    %306 = tpu.matmul %304, %305, %cst_114 {dimension_numbers = #tpu.dot_dimension_numbers<[1], [0], [0], [1], [0, 0, 1, 1], [], []>} : vector<64x32xbf16>, vector<32x128xbf16>, vector<64x128xf32> -> vector<64x128xf32>
    %c0_115 = arith.constant 0 : index
    %c0_116 = arith.constant 0 : index
    %307 = vector.load %arg12[%c0_115, %c0_116] : memref<1x128xf32, #tpu.memory_space<vmem>>, vector<1x128xf32>
    %308 = vector.broadcast %307 : vector<1x128xf32> to vector<64x128xf32>
    %309 = arith.addf %306, %308 : vector<64x128xf32>
    %310 = math.tanh %309 : vector<64x128xf32>
    %c0_117 = arith.constant 0 : index
    %c0_118 = arith.constant 0 : index
    %311 = vector.load %arg13[%c0_117, %c0_118] : memref<64x128xf32, #tpu.memory_space<vmem>>, vector<64x128xf32>
    tpu.vector_store %arg13[%c0_117, %c0_118], %310 {strides = array<i32>} : memref<64x128xf32, #tpu.memory_space<vmem>>, vector<64x128xf32>,
    return
  }
}

</mosaic_0001>

<llo_original>
// kernel: tpu_custom_call.1
$region0: #{tpu_custom_call.1}
  #allocation0 [shape = 'u32[]', space=smem, size = 0x4, offset = 0x4, fixed_abs, tag = 'smem constant byte address 0x4 - core index']
  #allocation1 [shape = 'u32[144,128]{1,0:T(1,128)}', space=vmem, size = 0x12000, scoped, tag = 'internal scratch']
  #allocation2 [shape = 'f32[64,32]{1,0:T(8,128)}', space=vmem, size = 0x8000, scoped, tag = 'scratch operand']
  #allocation3 [shape = 'f32[64,128]{1,0:T(8,128)}', space=vmem, size = 0x8000, scoped, tag = 'scratch operand']
  %s0 = inlined_call_operand.vmem [shape: bf16[64,4], index: 0, kind: input, shape index: {}]
  %s1 = inlined_call_operand.hbm [shape: bf16[4,32], index: 1, kind: input, shape index: {}]
  %s2 = inlined_call_operand.hbm [shape: f32[1,32], index: 2, kind: input, shape index: {}]
  %s3 = inlined_call_operand.hbm [shape: f32[8,128], index: 3, kind: input, shape index: {}]
  %s4 = inlined_call_operand.hbm [shape: f32[8,128], index: 4, kind: input, shape index: {}]
  %s5 = inlined_call_operand.vmem [shape: bf16[32,128], index: 5, kind: input, shape index: {}]
  %s6 = inlined_call_operand.vmem [shape: bf16[32,128], index: 6, kind: input, shape index: {}]
  %s7 = inlined_call_operand.hbm [shape: f32[1,128], index: 7, kind: input, shape index: {}]
  %s8 = inlined_call_operand.vmem [shape: bf16[32,128], index: 8, kind: input, shape index: {}]
  %s9 = inlined_call_operand.vmem [shape: bf16[32,128], index: 9, kind: input, shape index: {}]
  %s10 = inlined_call_operand.vmem [shape: f32[1,128], index: 10, kind: input, shape index: {}]
  %s11 = inlined_call_operand.hbm [shape: bf16[32,128], index: 11, kind: input, shape index: {}]
  %s12 = inlined_call_operand.vmem [shape: f32[1,128], index: 12, kind: input, shape index: {}]
  %s13 = inlined_call_operand.hbm [shape: f32[64,128], index: 13, kind: output, shape index: {}]
  %s14 = sld [smem:[#allocation0]]
  $region86: #{tpu_custom_call.1} parent=0
    _
  %s16 = ssub.s32 1, %s14
  %s17 = scalar_select 0, %s16, %s14
  $region1: #{tpu_custom_call.1} parent=0
    #allocation4 [shape = 'u8[1024]{0}', space=vmem, size = 0x400, scoped, tag = 'input window, operand 1, single buffered']
    #allocation5 [shape = 's32[1]{0}', space=sflag, size = 0x4, scoped, tag = 'scoped memory for tpu_custom_call.1']
    #allocation6 [shape = 's32[1]{0}', space=sflag, size = 0x4, scoped, tag = 'scoped memory for tpu_custom_call.1']
    #allocation7 [shape = 'u8[512]{0}', space=vmem, size = 0x400, scoped, tag = 'input window, operand 2, single buffered']
    #allocation8 [shape = 's32[1]{0}', space=sflag, size = 0x4, scoped, tag = 'scoped memory for tpu_custom_call.1']
    #allocation9 [shape = 'u8[4096]{0}', space=vmem, size = 0x1000, scoped, tag = 'input window, operand 3, single buffered']
    #allocation10 [shape = 'u8[4096]{0}', space=vmem, size = 0x1000, scoped, tag = 'input window, operand 4, single buffered']
    #allocation11 [shape = 's32[1]{0}', space=sflag, size = 0x4, scoped, tag = 'scoped memory for tpu_custom_call.1']
    #allocation12 [shape = 'u8[512]{0}', space=vmem, size = 0x400, scoped, tag = 'input window, operand 7, single buffered']
    #allocation13 [shape = 'u8[8192]{0}', space=vmem, size = 0x2000, scoped, tag = 'input window, operand 11, single buffered']
    #allocation14 [shape = 's32[1]{0}', space=sflag, size = 0x4, scoped, tag = 'scoped memory for tpu_custom_call.1']
    #allocation15 [shape = 'u8[32768]{0}', space=vmem, size = 0x8000, scoped, tag = 'output window, operand 0, single buffered']
    %18 = vsyncpa [#allocation5], 0
    %19 = vsyncpa [#allocation8], 0
    %20 = vsyncpa [#allocation11], 0
    %21 = vsyncpa [#allocation14], 0
    %22 = vsyncpa [#allocation6], 0
    // Predicated region
    $region2: #{tpu_custom_call.1} parent=1 // pred_check
      _
    $region3: #{tpu_custom_call.1} parent=1 // pred_check_branch
      %24 = sbr.rel (0) target = $region5
    $region4: #{tpu_custom_call.1} parent=1 // pred_region
      _
    $region5: #{tpu_custom_call.1} parent=1 // pred_fallthru
      _
    // Predicated region
    $region6: #{tpu_custom_call.1} parent=1 // pred_check
      _
    $region7: #{tpu_custom_call.1} parent=1 // pred_check_branch
      %26 = sbr.rel (0) target = $region9
    $region8: #{tpu_custom_call.1} parent=1 // pred_region
      %s28 = ssub.s32 32, 32
      %29 = vsyncadd [#allocation5], %s28
      %s31 = sshll.u32 [#allocation4], 4
      %s32 = int_to_ptr.vmem [resolvable:$true] %s31
      %34 = dma.hbm_to_vmem [thread:$0]  %s1, 32, %s32, [#allocation5]
    $region9: #{tpu_custom_call.1} parent=1 // pred_fallthru
      _
    // Predicated region
    $region10: #{tpu_custom_call.1} parent=1 // pred_check
      _
    $region11: #{tpu_custom_call.1} parent=1 // pred_check_branch
      %36 = sbr.rel (0) target = $region13
    $region12: #{tpu_custom_call.1} parent=1 // pred_region
      %s38 = ssub.s32 16, 16
      %39 = vsyncadd [#allocation8], %s38
      %s41 = sshll.u32 [#allocation7], 4
      %s42 = int_to_ptr.vmem [resolvable:$true] %s41
      %44 = dma.hbm_to_vmem [thread:$0]  %s2, 16, %s42, [#allocation8]
    $region13: #{tpu_custom_call.1} parent=1 // pred_fallthru
      _
    // Predicated region
    $region14: #{tpu_custom_call.1} parent=1 // pred_check
      _
    $region15: #{tpu_custom_call.1} parent=1 // pred_check_branch
      %46 = sbr.rel (0) target = $region17
    $region16: #{tpu_custom_call.1} parent=1 // pred_region
      %s48 = ssub.s32 128, 128
      %49 = vsyncadd [#allocation8], %s48
      %s51 = sshll.u32 [#allocation9], 4
      %s52 = int_to_ptr.vmem [resolvable:$true] %s51
      %54 = dma.hbm_to_vmem [thread:$0]  %s3, 128, %s52, [#allocation8]
    $region17: #{tpu_custom_call.1} parent=1 // pred_fallthru
      _
    // Predicated region
    $region18: #{tpu_custom_call.1} parent=1 // pred_check
      _
    $region19: #{tpu_custom_call.1} parent=1 // pred_check_branch
      %56 = sbr.rel (0) target = $region21
    $region20: #{tpu_custom_call.1} parent=1 // pred_region
      %s58 = ssub.s32 128, 128
      %59 = vsyncadd [#allocation11], %s58
      %s61 = sshll.u32 [#allocation10], 4
      %s62 = int_to_ptr.vmem [resolvable:$true] %s61
      %64 = dma.hbm_to_vmem [thread:$0]  %s4, 128, %s62, [#allocation11]
    $region21: #{tpu_custom_call.1} parent=1 // pred_fallthru
      _
    // Predicated region
    $region22: #{tpu_custom_call.1} parent=1 // pred_check
      _
    $region23: #{tpu_custom_call.1} parent=1 // pred_check_branch
      %66 = sbr.rel (0) target = $region25
    $region24: #{tpu_custom_call.1} parent=1 // pred_region
      _
    $region25: #{tpu_custom_call.1} parent=1 // pred_fallthru
      _
    // Predicated region
    $region26: #{tpu_custom_call.1} parent=1 // pred_check
      _
    $region27: #{tpu_custom_call.1} parent=1 // pred_check_branch
      %68 = sbr.rel (0) target = $region29
    $region28: #{tpu_custom_call.1} parent=1 // pred_region
      _
    $region29: #{tpu_custom_call.1} parent=1 // pred_fallthru
      _
    // Predicated region
    $region30: #{tpu_custom_call.1} parent=1 // pred_check
      _
    $region31: #{tpu_custom_call.1} parent=1 // pred_check_branch
      %70 = sbr.rel (0) target = $region33
    $region32: #{tpu_custom_call.1} parent=1 // pred_region
      %s72 = ssub.s32 16, 16
      %73 = vsyncadd [#allocation11], %s72
      %s75 = sshll.u32 [#allocation12], 4
      %s76 = int_to_ptr.vmem [resolvable:$true] %s75
      %78 = dma.hbm_to_vmem [thread:$0]  %s7, 16, %s76, [#allocation11]
    $region33: #{tpu_custom_call.1} parent=1 // pred_fallthru
      _
    // Predicated region
    $region34: #{tpu_custom_call.1} parent=1 // pred_check
      _
    $region35: #{tpu_custom_call.1} parent=1 // pred_check_branch
      %80 = sbr.rel (0) target = $region37
    $region36: #{tpu_custom_call.1} parent=1 // pred_region
      _
    $region37: #{tpu_custom_call.1} parent=1 // pred_fallthru
      _
    // Predicated region
    $region38: #{tpu_custom_call.1} parent=1 // pred_check
      _
    $region39: #{tpu_custom_call.1} parent=1 // pred_check_branch
      %82 = sbr.rel (0) target = $region41
    $region40: #{tpu_custom_call.1} parent=1 // pred_region
      _
    $region41: #{tpu_custom_call.1} parent=1 // pred_fallthru
      _
    // Predicated region
    $region42: #{tpu_custom_call.1} parent=1 // pred_check
      _
    $region43: #{tpu_custom_call.1} parent=1 // pred_check_branch
      %84 = sbr.rel (0) target = $region45
    $region44: #{tpu_custom_call.1} parent=1 // pred_region
      _
    $region45: #{tpu_custom_call.1} parent=1 // pred_fallthru
      _
    // Predicated region
    $region46: #{tpu_custom_call.1} parent=1 // pred_check
      _
    $region47: #{tpu_custom_call.1} parent=1 // pred_check_branch
      %86 = sbr.rel (0) target = $region49
    $region48: #{tpu_custom_call.1} parent=1 // pred_region
      %s88 = ssub.s32 256, 256
      %89 = vsyncadd [#allocation14], %s88
      %s90 = sshll.u32 [#allocation13], 4
      %s91 = int_to_ptr.vmem [resolvable:$true] %s90
      %96 = dma.hbm_to_vmem [thread:$0]  %s11, 256, %s91, [#allocation14], 64, 64, 4
    $region49: #{tpu_custom_call.1} parent=1 // pred_fallthru
      _
    // Predicated region
    $region50: #{tpu_custom_call.1} parent=1 // pred_check
      _
    $region51: #{tpu_custom_call.1} parent=1 // pred_check_branch
      %98 = sbr.rel (0) target = $region53
    $region52: #{tpu_custom_call.1} parent=1 // pred_region
      _
    $region53: #{tpu_custom_call.1} parent=1 // pred_fallthru
      _
    // Predicated region
    $region54: #{tpu_custom_call.1} parent=1 // pred_check
      _
    $region55: #{tpu_custom_call.1} parent=1 // pred_check_branch
      %100 = sbr.rel (0) target = $region57
    $region56: #{tpu_custom_call.1} parent=1 // pred_region
      %101 = dma.done [#allocation5], 32
    $region57: #{tpu_custom_call.1} parent=1 // pred_fallthru
      _
    // Predicated region
    $region58: #{tpu_custom_call.1} parent=1 // pred_check
      _
    $region59: #{tpu_custom_call.1} parent=1 // pred_check_branch
      %103 = sbr.rel (0) target = $region61
    $region60: #{tpu_custom_call.1} parent=1 // pred_region
      %104 = dma.done [#allocation8], 16
    $region61: #{tpu_custom_call.1} parent=1 // pred_fallthru
      _
    // Predicated region
    $region62: #{tpu_custom_call.1} parent=1 // pred_check
      _
    $region63: #{tpu_custom_call.1} parent=1 // pred_check_branch
      %106 = sbr.rel (0) target = $region65
    $region64: #{tpu_custom_call.1} parent=1 // pred_region
      %107 = dma.done [#allocation8], 128
    $region65: #{tpu_custom_call.1} parent=1 // pred_fallthru
      _
    // Predicated region
    $region66: #{tpu_custom_call.1} parent=1 // pred_check
      _
    $region67: #{tpu_custom_call.1} parent=1 // pred_check_branch
      %109 = sbr.rel (0) target = $region69
    $region68: #{tpu_custom_call.1} parent=1 // pred_region
      %110 = dma.done [#allocation11], 128
    $region69: #{tpu_custom_call.1} parent=1 // pred_fallthru
      _
    // Predicated region
    $region70: #{tpu_custom_call.1} parent=1 // pred_check
      _
    $region71: #{tpu_custom_call.1} parent=1 // pred_check_branch
      %112 = sbr.rel (0) target = $region73
    $region72: #{tpu_custom_call.1} parent=1 // pred_region
      %113 = dma.done [#allocation11], 16
    $region73: #{tpu_custom_call.1} parent=1 // pred_fallthru
      _
    // Predicated region
    $region74: #{tpu_custom_call.1} parent=1 // pred_check
      _
    $region75: #{tpu_custom_call.1} parent=1 // pred_check_branch
      %115 = sbr.rel (0) target = $region77
    $region76: #{tpu_custom_call.1} parent=1 // pred_region
      %116 = dma.done [#allocation14], 256
    $region77: #{tpu_custom_call.1} parent=1 // pred_fallthru
      _
    %v118 = vld [vmem:[%s0] sm:$0xf]
    %v119 = vld [vmem:[%s0 + $0x4] sm:$0xf]
    %v120 = vld [vmem:[%s0 + $0x8] sm:$0xf]
    %v121 = vld [vmem:[%s0 + $0xc] sm:$0xf]
    %v122 = vld [vmem:[%s0 + $0x10] sm:$0xf]
    %v123 = vld [vmem:[%s0 + $0x14] sm:$0xf]
    %v124 = vld [vmem:[%s0 + $0x18] sm:$0xf]
    %v125 = vld [vmem:[%s0 + $0x1c] sm:$0xf]
    %v126 = vld [vmem:[#allocation4] sm:$0x3]
    %v127 = vld [vmem:[#allocation7] sm:$0x1]
    %v129 = vlaneseq
    %v130 = vshrl.u32 %v129, 7
    %v131 = vsub.s32 0, %v130
    %v132 = vrot.slane %v127, %v131
    %v142 = vunpack.c.l.b16 %v118
    %v143 = vunpack.c.l.b16 %v119
    %v144 = vunpack.c.l.b16 %v120
    %v145 = vunpack.c.l.b16 %v121
    %v146 = vunpack.c.l.b16 %v122
    %v147 = vunpack.c.l.b16 %v123
    %v148 = vunpack.c.l.b16 %v124
    %v149 = vunpack.c.l.b16 %v125
    %v150 = vpack.c.b16 %v143, %v142
    %v151 = vpack.c.b16 %v145, %v144
    %v152 = vpack.c.b16 %v147, %v146
    %v153 = vpack.c.b16 %v149, %v148
    %vm154 = vcmask 31744
    %v156 = vsel %vm154, %v150, 0
    %v159 = vsel %vm154, %v151, 0
    %v162 = vsel %vm154, %v152, 0
    %v165 = vsel %vm154, %v153, 0
    %vm167 = vcmask 1041408
    %v169 = vsel %vm167, %v126, 0
    %171 = vmatprep.subr.bf16.mxu0 0
    %172 = vmatpush1.bf16.msra.mxu0 %v169
    %173 = vmatprep.subr.bf16.mxu0 0
    %174 = vmatpush1.bf16.msra.mxu0 0
    %175 = vmatprep.subr.bf16.mxu0 0
    %176 = vmatpush1.bf16.msra.mxu0 0
    %177 = vmatprep.subr.bf16.mxu0 0
    %178 = vmatpush1.bf16.msra.mxu0 0
    %179 = vmatprep.subr.bf16.mxu0 0
    %180 = vmatpush1.bf16.msra.mxu0 0
    %181 = vmatprep.subr.bf16.mxu0 0
    %182 = vmatpush1.bf16.msra.mxu0 0
    %183 = vmatprep.subr.bf16.mxu0 0
    %184 = vmatpush1.bf16.msra.mxu0 0
    %185 = vmatprep.subr.bf16.mxu0 0
    %186 = vmatpush1.bf16.msra.mxu0 0
    %187 = vmatprep.subr.bf16.mxu0 0
    %188 = vmatpush1.bf16.msra.mxu0 0
    %189 = vmatprep.subr.bf16.mxu0 0
    %190 = vmatpush1.bf16.msra.mxu0 0
    %191 = vmatprep.subr.bf16.mxu0 0
    %192 = vmatpush1.bf16.msra.mxu0 0
    %193 = vmatprep.subr.bf16.mxu0 0
    %194 = vmatpush1.bf16.msra.mxu0 0
    %195 = vmatprep.subr.bf16.mxu0 0
    %196 = vmatpush1.bf16.msra.mxu0 0
    %197 = vmatprep.subr.bf16.mxu0 0
    %198 = vmatpush1.bf16.msra.mxu0 0
    %199 = vmatprep.subr.bf16.mxu0 0
    %200 = vmatpush1.bf16.msra.mxu0 0
    %201 = vmatprep.subr.bf16.mxu0 0
    %202 = vmatpush1.bf16.msra.mxu0 0
    %203 = vmatprep.mubr.bf16.mxu0 0
    %204 = vmatmul.mubr.bf16.gmra.mrb[0].mxu0 %v156
    %v205 = vpop.f32.mrb[0].mxu0
    %v206 = vadd.f32 %v132, %v205
    %v207 = vpop.f32.mrb[0].mxu0
    %v208 = vpop.f32.mrb[0].mxu0
    %v209 = vadd.f32 %v132, %v208
    %v210 = vpop.f32.mrb[0].mxu0
    %211 = vmatprep.mubr.bf16.mxu0 0
    %212 = vmatmul.mubr.bf16.gmra.mrb[0].mxu0 %v159
    %v213 = vpop.f32.mrb[0].mxu0
    %v214 = vadd.f32 %v132, %v213
    %v215 = vpop.f32.mrb[0].mxu0
    %v216 = vpop.f32.mrb[0].mxu0
    %v217 = vadd.f32 %v132, %v216
    %v218 = vpop.f32.mrb[0].mxu0
    %219 = vmatprep.mubr.bf16.mxu0 0
    %220 = vmatmul.mubr.bf16.gmra.mrb[0].mxu0 %v162
    %v221 = vpop.f32.mrb[0].mxu0
    %v222 = vadd.f32 %v132, %v221
    %v223 = vpop.f32.mrb[0].mxu0
    %v224 = vpop.f32.mrb[0].mxu0
    %v225 = vadd.f32 %v132, %v224
    %v226 = vpop.f32.mrb[0].mxu0
    %227 = vmatprep.mubr.bf16.mxu0 0
    %228 = vmatmul.mubr.bf16.gmra.mrb[0].mxu0 %v165
    %v229 = vpop.f32.mrb[0].mxu0
    %v230 = vadd.f32 %v132, %v229
    %v231 = vpop.f32.mrb[0].mxu0
    %v232 = vpop.f32.mrb[0].mxu0
    %v233 = vadd.f32 %v132, %v232
    %v234 = vpop.f32.mrb[0].mxu0
    %235 = vdwg.mxu0
    %vm236 = vcmask 261120
    %237 = vst.msk [vmem:[#allocation2] sm:$0xff] %vm236, %v206
    %238 = vst.msk [vmem:[#allocation2 + $0x8] sm:$0xff] %vm236, %v209
    %239 = vst.msk [vmem:[#allocation2 + $0x10] sm:$0xff] %vm236, %v214
    %240 = vst.msk [vmem:[#allocation2 + $0x18] sm:$0xff] %vm236, %v217
    %241 = vst.msk [vmem:[#allocation2 + $0x20] sm:$0xff] %vm236, %v222
    %242 = vst.msk [vmem:[#allocation2 + $0x28] sm:$0xff] %vm236, %v225
    %243 = vst.msk [vmem:[#allocation2 + $0x30] sm:$0xff] %vm236, %v230
    %244 = vst.msk [vmem:[#allocation2 + $0x38] sm:$0xff] %vm236, %v233
    %v245 = vld [vmem:[#allocation9] sm:$0xff]
    %v246 = vld [vmem:[#allocation10] sm:$0xff]
    %v247 = vld [vmem:[%s5] sm:$0xf]
    %v248 = vld [vmem:[%s5 + $0x4] sm:$0xf]
    %v249 = vld [vmem:[%s5 + $0x8] sm:$0xf]
    %v250 = vld [vmem:[%s5 + $0xc] sm:$0xf]
    %v251 = vld [vmem:[%s6] sm:$0xf]
    %v252 = vld [vmem:[%s6 + $0x4] sm:$0xf]
    %v253 = vld [vmem:[%s6 + $0x8] sm:$0xf]
    %v254 = vld [vmem:[%s6 + $0xc] sm:$0xf]
    %v255 = vld [vmem:[#allocation12] sm:$0x1]
    %v256 = vld [vmem:[#allocation2] sm:$0xff]
    %v257 = vld [vmem:[#allocation2 + $0x8] sm:$0xff]
    %v258 = vld [vmem:[#allocation2 + $0x10] sm:$0xff]
    %v259 = vld [vmem:[#allocation2 + $0x18] sm:$0xff]
    %v260 = vld [vmem:[#allocation2 + $0x20] sm:$0xff]
    %v261 = vld [vmem:[#allocation2 + $0x28] sm:$0xff]
    %v262 = vld [vmem:[#allocation2 + $0x30] sm:$0xff]
    %v263 = vld [vmem:[#allocation2 + $0x38] sm:$0xff]
    %v264 = vpack.c.bf16 %v257, %v256
    %v265 = vpack.c.bf16 %v259, %v258
    %v266 = vpack.c.bf16 %v261, %v260
    %v267 = vpack.c.bf16 %v263, %v262
    %v269 = vlaneseq
    %v270 = vshrl.u32 %v269, 7
    %v271 = vsub.s32 0, %v270
    %v272 = vrot.slane %v255, %v271
    %v278 = vunpack.c.l.b16 %v247
    %v279 = vunpack.c.l.b16 %v248
    %v280 = vunpack.c.l.b16 %v249
    %v281 = vunpack.c.l.b16 %v250
    %v282 = vpack.c.b16 %v279, %v278
    %v283 = vpack.c.b16 %v281, %v280
    %v287 = vsel %vm236, %v264, 0
    %v290 = vsel %vm236, %v265, 0
    %v293 = vsel %vm236, %v266, 0
    %v296 = vsel %vm236, %v267, 0
    %298 = vmatprep.subr.bf16.mxu0 0
    %299 = vmatpush1.bf16.msra.mxu0 %v282
    %300 = vmatprep.subr.bf16.mxu0 0
    %301 = vmatpush1.bf16.msra.mxu0 %v283
    %302 = vmatprep.subr.bf16.mxu0 0
    %303 = vmatpush1.bf16.msra.mxu0 0
    %304 = vmatprep.subr.bf16.mxu0 0
    %305 = vmatpush1.bf16.msra.mxu0 0
    %306 = vmatprep.subr.bf16.mxu0 0
    %307 = vmatpush1.bf16.msra.mxu0 0
    %308 = vmatprep.subr.bf16.mxu0 0
    %309 = vmatpush1.bf16.msra.mxu0 0
    %310 = vmatprep.subr.bf16.mxu0 0
    %311 = vmatpush1.bf16.msra.mxu0 0
    %312 = vmatprep.subr.bf16.mxu0 0
    %313 = vmatpush1.bf16.msra.mxu0 0
    %314 = vmatprep.subr.bf16.mxu0 0
    %315 = vmatpush1.bf16.msra.mxu0 0
    %316 = vmatprep.subr.bf16.mxu0 0
    %317 = vmatpush1.bf16.msra.mxu0 0
    %318 = vmatprep.subr.bf16.mxu0 0
    %319 = vmatpush1.bf16.msra.mxu0 0
    %320 = vmatprep.subr.bf16.mxu0 0
    %321 = vmatpush1.bf16.msra.mxu0 0
    %322 = vmatprep.subr.bf16.mxu0 0
    %323 = vmatpush1.bf16.msra.mxu0 0
    %324 = vmatprep.subr.bf16.mxu0 0
    %325 = vmatpush1.bf16.msra.mxu0 0
    %326 = vmatprep.subr.bf16.mxu0 0
    %327 = vmatpush1.bf16.msra.mxu0 0
    %328 = vmatprep.subr.bf16.mxu0 0
    %329 = vmatpush1.bf16.msra.mxu0 0
    %330 = vmatprep.mubr.bf16.mxu0 0
    %331 = vmatmul.mubr.bf16.gmra.mrb[0].mxu0 %v287
    %v332 = vpop.f32.mrb[0].mxu0
    %v333 = vadd.f32 %v272, %v332
    %v334 = vpop.f32.mrb[0].mxu0
    %v335 = vpop.f32.mrb[0].mxu0
    %v336 = vadd.f32 %v272, %v335
    %v337 = vpop.f32.mrb[0].mxu0
    %338 = vmatprep.mubr.bf16.mxu0 0
    %339 = vmatmul.mubr.bf16.gmra.mrb[0].mxu0 %v290
    %v340 = vpop.f32.mrb[0].mxu0
    %v341 = vadd.f32 %v272, %v340
    %v342 = vpop.f32.mrb[0].mxu0
    %v343 = vpop.f32.mrb[0].mxu0
    %v344 = vadd.f32 %v272, %v343
    %v345 = vpop.f32.mrb[0].mxu0
    %346 = vmatprep.mubr.bf16.mxu0 0
    %347 = vmatmul.mubr.bf16.gmra.mrb[0].mxu0 %v293
    %v348 = vpop.f32.mrb[0].mxu0
    %v349 = vadd.f32 %v272, %v348
    %v350 = vpop.f32.mrb[0].mxu0
    %v351 = vpop.f32.mrb[0].mxu0
    %v352 = vadd.f32 %v272, %v351
    %v353 = vpop.f32.mrb[0].mxu0
    %354 = vmatprep.mubr.bf16.mxu0 0
    %355 = vmatmul.mubr.bf16.gmra.mrb[0].mxu0 %v296
    %v356 = vpop.f32.mrb[0].mxu0
    %v357 = vadd.f32 %v272, %v356
    %v358 = vpop.f32.mrb[0].mxu0
    %v359 = vpop.f32.mrb[0].mxu0
    %v360 = vadd.f32 %v272, %v359
    %v361 = vpop.f32.mrb[0].mxu0
    %362 = vdwg.mxu0
    %363 = vst [vmem:[#allocation3] sm:$0xff] %v333
    %364 = vst [vmem:[#allocation3 + $0x8] sm:$0xff] %v336
    %365 = vst [vmem:[#allocation3 + $0x10] sm:$0xff] %v341
    %366 = vst [vmem:[#allocation3 + $0x18] sm:$0xff] %v344
    %367 = vst [vmem:[#allocation3 + $0x20] sm:$0xff] %v349
    %368 = vst [vmem:[#allocation3 + $0x28] sm:$0xff] %v352
    %369 = vst [vmem:[#allocation3 + $0x30] sm:$0xff] %v357
    %370 = vst [vmem:[#allocation3 + $0x38] sm:$0xff] %v360
    %v371 = vld [vmem:[#allocation3] sm:$0xff]
    %v376 = vunpack.c.l.b16 %v251
    %v377 = vunpack.c.l.b16 %v252
    %v378 = vunpack.c.l.b16 %v253
    %v379 = vunpack.c.l.b16 %v254
    %v380 = vpack.c.b16 %v377, %v376
    %v381 = vpack.c.b16 %v379, %v378
    %v385 = vsel %vm236, 0, 0
    %387 = vmatprep.subr.bf16.mxu0 0
    %388 = vmatpush1.bf16.msra.mxu0 %v380
    %389 = vmatprep.subr.bf16.mxu0 0
    %390 = vmatpush1.bf16.msra.mxu0 %v381
    %391 = vmatprep.subr.bf16.mxu0 0
    %392 = vmatpush1.bf16.msra.mxu0 0
    %393 = vmatprep.subr.bf16.mxu0 0
    %394 = vmatpush1.bf16.msra.mxu0 0
    %395 = vmatprep.subr.bf16.mxu0 0
    %396 = vmatpush1.bf16.msra.mxu0 0
    %397 = vmatprep.subr.bf16.mxu0 0
    %398 = vmatpush1.bf16.msra.mxu0 0
    %399 = vmatprep.subr.bf16.mxu0 0
    %400 = vmatpush1.bf16.msra.mxu0 0
    %401 = vmatprep.subr.bf16.mxu0 0
    %402 = vmatpush1.bf16.msra.mxu0 0
    %403 = vmatprep.subr.bf16.mxu0 0
    %404 = vmatpush1.bf16.msra.mxu0 0
    %405 = vmatprep.subr.bf16.mxu0 0
    %406 = vmatpush1.bf16.msra.mxu0 0
    %407 = vmatprep.subr.bf16.mxu0 0
    %408 = vmatpush1.bf16.msra.mxu0 0
    %409 = vmatprep.subr.bf16.mxu0 0
    %410 = vmatpush1.bf16.msra.mxu0 0
    %411 = vmatprep.subr.bf16.mxu0 0
    %412 = vmatpush1.bf16.msra.mxu0 0
    %413 = vmatprep.subr.bf16.mxu0 0
    %414 = vmatpush1.bf16.msra.mxu0 0
    %415 = vmatprep.subr.bf16.mxu0 0
    %416 = vmatpush1.bf16.msra.mxu0 0
    %417 = vmatprep.subr.bf16.mxu0 0
    %418 = vmatpush1.bf16.msra.mxu0 0
    %419 = vmatprep.mubr.bf16.mxu0 0
    %420 = vmatmul.mubr.bf16.gmra.mrb[0].mxu0 %v385
    %v421 = vpop.f32.mrb[0].mxu0
    %v422 = vadd.f32 0.0, %v421
    %v423 = vpop.f32.mrb[0].mxu0
    %v424 = vpop.f32.mrb[0].mxu0
    %v425 = vpop.f32.mrb[0].mxu0
    %426 = vdwg.mxu0
    %v427 = vadd.f32 %v371, %v422
    %v428 = vtanh.pop %v427
    %v429 = vmul.f32 %v245, %v428
    %v430 = vadd.f32 %v429, %v246
    %v431 = vmul.f32 %v430, 0.0
    %433 = vrot.lane.b32.xlu0 %v430, 64
    %v434 = vpop.permute.xlu0 %433
    %v436 = vmul.f32 %v430, %v434
    %438 = vrot.lane.b32.xlu0 %v436, 32
    %v439 = vpop.permute.xlu0 %438
    %v441 = vadd.f32 %v431, %v439
    %v442 = vtanh.pop %v441
    %444 = vrot.lane.b32.xlu0 %v442, 64
    %v445 = vpop.permute.xlu0 %444
    %v447 = vmul.f32 %v430, %v445
    %449 = vrot.lane.b32.xlu0 %v447, 32
    %v450 = vpop.permute.xlu0 %449
    %452 = vst.msk [vmem:[#allocation2] sm:$0xff] %vm236, %v450
    %v453 = vld [vmem:[#allocation3 + $0x8] sm:$0xff]
    %v454 = vpack.c.bf16 %v447, %v447
    %456 = vrot.lane.b32.xlu0 %v454, 32
    %v457 = vpop.permute.xlu0 %456
    %v459 = vsel %vm236, %v457, 0
    %461 = vmatprep.subr.bf16.mxu0 0
    %462 = vmatpush1.bf16.msra.mxu0 %v380
    %463 = vmatprep.subr.bf16.mxu0 0
    %464 = vmatpush1.bf16.msra.mxu0 %v381
    %465 = vmatprep.subr.bf16.mxu0 0
    %466 = vmatpush1.bf16.msra.mxu0 0
    %467 = vmatprep.subr.bf16.mxu0 0
    %468 = vmatpush1.bf16.msra.mxu0 0
    %469 = vmatprep.subr.bf16.mxu0 0
    %470 = vmatpush1.bf16.msra.mxu0 0
    %471 = vmatprep.subr.bf16.mxu0 0
    %472 = vmatpush1.bf16.msra.mxu0 0
    %473 = vmatprep.subr.bf16.mxu0 0
    %474 = vmatpush1.bf16.msra.mxu0 0
    %475 = vmatprep.subr.bf16.mxu0 0
    %476 = vmatpush1.bf16.msra.mxu0 0
    %477 = vmatprep.subr.bf16.mxu0 0
    %478 = vmatpush1.bf16.msra.mxu0 0
    %479 = vmatprep.subr.bf16.mxu0 0
    %480 = vmatpush1.bf16.msra.mxu0 0
    %481 = vmatprep.subr.bf16.mxu0 0
    %482 = vmatpush1.bf16.msra.mxu0 0
    %483 = vmatprep.subr.bf16.mxu0 0
    %484 = vmatpush1.bf16.msra.mxu0 0
    %485 = vmatprep.subr.bf16.mxu0 0
    %486 = vmatpush1.bf16.msra.mxu0 0
    %487 = vmatprep.subr.bf16.mxu0 0
    %488 = vmatpush1.bf16.msra.mxu0 0
    %489 = vmatprep.subr.bf16.mxu0 0
    %490 = vmatpush1.bf16.msra.mxu0 0
    %491 = vmatprep.subr.bf16.mxu0 0
    %492 = vmatpush1.bf16.msra.mxu0 0
    %493 = vmatprep.mubr.bf16.mxu0 0
    %494 = vmatmul.mubr.bf16.gmra.mrb[0].mxu0 %v459
    %v495 = vpop.f32.mrb[0].mxu0
    %v496 = vadd.f32 0.0, %v495
    %v497 = vpop.f32.mrb[0].mxu0
    %v498 = vpop.f32.mrb[0].mxu0
    %v499 = vpop.f32.mrb[0].mxu0
    %500 = vdwg.mxu0
    %v501 = vadd.f32 %v453, %v496
    %v502 = vtanh.pop %v501
    %v503 = vmul.f32 %v245, %v502
    %v504 = vadd.f32 %v503, %v246
    %v505 = vmul.f32 %v504, %v441
    %507 = vrot.lane.b32.xlu0 %v504, 64
    %v508 = vpop.permute.xlu0 %507
    %v510 = vmul.f32 %v504, %v508
    %512 = vrot.lane.b32.xlu0 %v510, 32
    %v513 = vpop.permute.xlu0 %512
    %v515 = vadd.f32 %v505, %v513
    %v516 = vtanh.pop %v515
    %518 = vrot.lane.b32.xlu0 %v516, 64
    %v519 = vpop.permute.xlu0 %518
    %v521 = vmul.f32 %v504, %v519
    %523 = vrot.lane.b32.xlu0 %v521, 32
    %v524 = vpop.permute.xlu0 %523
    %526 = vst.msk [vmem:[#allocation2 + $0x8] sm:$0xff] %vm236, %v524
    %v527 = vld [vmem:[#allocation3 + $0x10] sm:$0xff]
    %v528 = vpack.c.bf16 %v521, %v521
    %530 = vrot.lane.b32.xlu0 %v528, 32
    %v531 = vpop.permute.xlu0 %530
    %v533 = vsel %vm236, %v531, 0
    %535 = vmatprep.subr.bf16.mxu0 0
    %536 = vmatpush1.bf16.msra.mxu0 %v380
    %537 = vmatprep.subr.bf16.mxu0 0
    %538 = vmatpush1.bf16.msra.mxu0 %v381
    %539 = vmatprep.subr.bf16.mxu0 0
    %540 = vmatpush1.bf16.msra.mxu0 0
    %541 = vmatprep.subr.bf16.mxu0 0
    %542 = vmatpush1.bf16.msra.mxu0 0
    %543 = vmatprep.subr.bf16.mxu0 0
    %544 = vmatpush1.bf16.msra.mxu0 0
    %545 = vmatprep.subr.bf16.mxu0 0
    %546 = vmatpush1.bf16.msra.mxu0 0
    %547 = vmatprep.subr.bf16.mxu0 0
    %548 = vmatpush1.bf16.msra.mxu0 0
    %549 = vmatprep.subr.bf16.mxu0 0
    %550 = vmatpush1.bf16.msra.mxu0 0
    %551 = vmatprep.subr.bf16.mxu0 0
    %552 = vmatpush1.bf16.msra.mxu0 0
    %553 = vmatprep.subr.bf16.mxu0 0
    %554 = vmatpush1.bf16.msra.mxu0 0
    %555 = vmatprep.subr.bf16.mxu0 0
    %556 = vmatpush1.bf16.msra.mxu0 0
    %557 = vmatprep.subr.bf16.mxu0 0
    %558 = vmatpush1.bf16.msra.mxu0 0
    %559 = vmatprep.subr.bf16.mxu0 0
    %560 = vmatpush1.bf16.msra.mxu0 0
    %561 = vmatprep.subr.bf16.mxu0 0
    %562 = vmatpush1.bf16.msra.mxu0 0
    %563 = vmatprep.subr.bf16.mxu0 0
    %564 = vmatpush1.bf16.msra.mxu0 0
    %565 = vmatprep.subr.bf16.mxu0 0
    %566 = vmatpush1.bf16.msra.mxu0 0
    %567 = vmatprep.mubr.bf16.mxu0 0
    %568 = vmatmul.mubr.bf16.gmra.mrb[0].mxu0 %v533
    %v569 = vpop.f32.mrb[0].mxu0
    %v570 = vadd.f32 0.0, %v569
    %v571 = vpop.f32.mrb[0].mxu0
    %v572 = vpop.f32.mrb[0].mxu0
    %v573 = vpop.f32.mrb[0].mxu0
    %574 = vdwg.mxu0
    %v575 = vadd.f32 %v527, %v570
    %v576 = vtanh.pop %v575
    %v577 = vmul.f32 %v245, %v576
    %v578 = vadd.f32 %v577, %v246
    %v579 = vmul.f32 %v578, %v515
    %581 = vrot.lane.b32.xlu0 %v578, 64
    %v582 = vpop.permute.xlu0 %581
    %v584 = vmul.f32 %v578, %v582
    %586 = vrot.lane.b32.xlu0 %v584, 32
    %v587 = vpop.permute.xlu0 %586
    %v589 = vadd.f32 %v579, %v587
    %v590 = vtanh.pop %v589
    %592 = vrot.lane.b32.xlu0 %v590, 64
    %v593 = vpop.permute.xlu0 %592
    %v595 = vmul.f32 %v578, %v593
    %597 = vrot.lane.b32.xlu0 %v595, 32
    %v598 = vpop.permute.xlu0 %597
    %600 = vst.msk [vmem:[#allocation2 + $0x10] sm:$0xff] %vm236, %v598
    %v601 = vld [vmem:[#allocation3 + $0x18] sm:$0xff]
    %v602 = vpack.c.bf16 %v595, %v595
    %604 = vrot.lane.b32.xlu0 %v602, 32
    %v605 = vpop.permute.xlu0 %604
    %v607 = vsel %vm236, %v605, 0
    %609 = vmatprep.subr.bf16.mxu0 0
    %610 = vmatpush1.bf16.msra.mxu0 %v380
    %611 = vmatprep.subr.bf16.mxu0 0
    %612 = vmatpush1.bf16.msra.mxu0 %v381
    %613 = vmatprep.subr.bf16.mxu0 0
    %614 = vmatpush1.bf16.msra.mxu0 0
    %615 = vmatprep.subr.bf16.mxu0 0
    %616 = vmatpush1.bf16.msra.mxu0 0
    %617 = vmatprep.subr.bf16.mxu0 0
    %618 = vmatpush1.bf16.msra.mxu0 0
    %619 = vmatprep.subr.bf16.mxu0 0
    %620 = vmatpush1.bf16.msra.mxu0 0
    %621 = vmatprep.subr.bf16.mxu0 0
    %622 = vmatpush1.bf16.msra.mxu0 0
    %623 = vmatprep.subr.bf16.mxu0 0
    %624 = vmatpush1.bf16.msra.mxu0 0
    %625 = vmatprep.subr.bf16.mxu0 0
    %626 = vmatpush1.bf16.msra.mxu0 0
    %627 = vmatprep.subr.bf16.mxu0 0
    %628 = vmatpush1.bf16.msra.mxu0 0
    %629 = vmatprep.subr.bf16.mxu0 0
    %630 = vmatpush1.bf16.msra.mxu0 0
    %631 = vmatprep.subr.bf16.mxu0 0
    %632 = vmatpush1.bf16.msra.mxu0 0
    %633 = vmatprep.subr.bf16.mxu0 0
    %634 = vmatpush1.bf16.msra.mxu0 0
    %635 = vmatprep.subr.bf16.mxu0 0
    %636 = vmatpush1.bf16.msra.mxu0 0
    %637 = vmatprep.subr.bf16.mxu0 0
    %638 = vmatpush1.bf16.msra.mxu0 0
    %639 = vmatprep.subr.bf16.mxu0 0
    %640 = vmatpush1.bf16.msra.mxu0 0
    %641 = vmatprep.mubr.bf16.mxu0 0
    %642 = vmatmul.mubr.bf16.gmra.mrb[0].mxu0 %v607
    %v643 = vpop.f32.mrb[0].mxu0
    %v644 = vadd.f32 0.0, %v643
    %v645 = vpop.f32.mrb[0].mxu0
    %v646 = vpop.f32.mrb[0].mxu0
    %v647 = vpop.f32.mrb[0].mxu0
    %648 = vdwg.mxu0
    %v649 = vadd.f32 %v601, %v644
    %v650 = vtanh.pop %v649
    %v651 = vmul.f32 %v245, %v650
    %v652 = vadd.f32 %v651, %v246
    %v653 = vmul.f32 %v652, %v589
    %655 = vrot.lane.b32.xlu0 %v652, 64
    %v656 = vpop.permute.xlu0 %655
    %v658 = vmul.f32 %v652, %v656
    %660 = vrot.lane.b32.xlu0 %v658, 32
    %v661 = vpop.permute.xlu0 %660
    %v663 = vadd.f32 %v653, %v661
    %v664 = vtanh.pop %v663
    %666 = vrot.lane.b32.xlu0 %v664, 64
    %v667 = vpop.permute.xlu0 %666
    %v669 = vmul.f32 %v652, %v667
    %671 = vrot.lane.b32.xlu0 %v669, 32
    %v672 = vpop.permute.xlu0 %671
    %674 = vst.msk [vmem:[#allocation2 + $0x18] sm:$0xff] %vm236, %v672
    %v675 = vld [vmem:[#allocation3 + $0x20] sm:$0xff]
    %v676 = vpack.c.bf16 %v669, %v669
    %678 = vrot.lane.b32.xlu0 %v676, 32
    %v679 = vpop.permute.xlu0 %678
    %v681 = vsel %vm236, %v679, 0
    %683 = vmatprep.subr.bf16.mxu0 0
    %684 = vmatpush1.bf16.msra.mxu0 %v380
    %685 = vmatprep.subr.bf16.mxu0 0
    %686 = vmatpush1.bf16.msra.mxu0 %v381
    %687 = vmatprep.subr.bf16.mxu0 0
    %688 = vmatpush1.bf16.msra.mxu0 0
    %689 = vmatprep.subr.bf16.mxu0 0
    %690 = vmatpush1.bf16.msra.mxu0 0
    %691 = vmatprep.subr.bf16.mxu0 0
    %692 = vmatpush1.bf16.msra.mxu0 0
    %693 = vmatprep.subr.bf16.mxu0 0
    %694 = vmatpush1.bf16.msra.mxu0 0
    %695 = vmatprep.subr.bf16.mxu0 0
    %696 = vmatpush1.bf16.msra.mxu0 0
    %697 = vmatprep.subr.bf16.mxu0 0
    %698 = vmatpush1.bf16.msra.mxu0 0
    %699 = vmatprep.subr.bf16.mxu0 0
    %700 = vmatpush1.bf16.msra.mxu0 0
    %701 = vmatprep.subr.bf16.mxu0 0
    %702 = vmatpush1.bf16.msra.mxu0 0
    %703 = vmatprep.subr.bf16.mxu0 0
    %704 = vmatpush1.bf16.msra.mxu0 0
    %705 = vmatprep.subr.bf16.mxu0 0
    %706 = vmatpush1.bf16.msra.mxu0 0
    %707 = vmatprep.subr.bf16.mxu0 0
    %708 = vmatpush1.bf16.msra.mxu0 0
    %709 = vmatprep.subr.bf16.mxu0 0
    %710 = vmatpush1.bf16.msra.mxu0 0
    %711 = vmatprep.subr.bf16.mxu0 0
    %712 = vmatpush1.bf16.msra.mxu0 0
    %713 = vmatprep.subr.bf16.mxu0 0
    %714 = vmatpush1.bf16.msra.mxu0 0
    %715 = vmatprep.mubr.bf16.mxu0 0
    %716 = vmatmul.mubr.bf16.gmra.mrb[0].mxu0 %v681
    %v717 = vpop.f32.mrb[0].mxu0
    %v718 = vadd.f32 0.0, %v717
    %v719 = vpop.f32.mrb[0].mxu0
    %v720 = vpop.f32.mrb[0].mxu0
    %v721 = vpop.f32.mrb[0].mxu0
    %722 = vdwg.mxu0
    %v723 = vadd.f32 %v675, %v718
    %v724 = vtanh.pop %v723
    %v725 = vmul.f32 %v245, %v724
    %v726 = vadd.f32 %v725, %v246
    %v727 = vmul.f32 %v726, %v663
    %729 = vrot.lane.b32.xlu0 %v726, 64
    %v730 = vpop.permute.xlu0 %729
    %v732 = vmul.f32 %v726, %v730
    %734 = vrot.lane.b32.xlu0 %v732, 32
    %v735 = vpop.permute.xlu0 %734
    %v737 = vadd.f32 %v727, %v735
    %v738 = vtanh.pop %v737
    %740 = vrot.lane.b32.xlu0 %v738, 64
    %v741 = vpop.permute.xlu0 %740
    %v743 = vmul.f32 %v726, %v741
    %745 = vrot.lane.b32.xlu0 %v743, 32
    %v746 = vpop.permute.xlu0 %745
    %748 = vst.msk [vmem:[#allocation2 + $0x20] sm:$0xff] %vm236, %v746
    %v749 = vld [vmem:[#allocation3 + $0x28] sm:$0xff]
    %v750 = vpack.c.bf16 %v743, %v743
    %752 = vrot.lane.b32.xlu0 %v750, 32
    %v753 = vpop.permute.xlu0 %752
    %v755 = vsel %vm236, %v753, 0
    %757 = vmatprep.subr.bf16.mxu0 0
    %758 = vmatpush1.bf16.msra.mxu0 %v380
    %759 = vmatprep.subr.bf16.mxu0 0
    %760 = vmatpush1.bf16.msra.mxu0 %v381
    %761 = vmatprep.subr.bf16.mxu0 0
    %762 = vmatpush1.bf16.msra.mxu0 0
    %763 = vmatprep.subr.bf16.mxu0 0
    %764 = vmatpush1.bf16.msra.mxu0 0
    %765 = vmatprep.subr.bf16.mxu0 0
    %766 = vmatpush1.bf16.msra.mxu0 0
    %767 = vmatprep.subr.bf16.mxu0 0
    %768 = vmatpush1.bf16.msra.mxu0 0
    %769 = vmatprep.subr.bf16.mxu0 0
    %770 = vmatpush1.bf16.msra.mxu0 0
    %771 = vmatprep.subr.bf16.mxu0 0
    %772 = vmatpush1.bf16.msra.mxu0 0
    %773 = vmatprep.subr.bf16.mxu0 0
    %774 = vmatpush1.bf16.msra.mxu0 0
    %775 = vmatprep.subr.bf16.mxu0 0
    %776 = vmatpush1.bf16.msra.mxu0 0
    %777 = vmatprep.subr.bf16.mxu0 0
    %778 = vmatpush1.bf16.msra.mxu0 0
    %779 = vmatprep.subr.bf16.mxu0 0
    %780 = vmatpush1.bf16.msra.mxu0 0
    %781 = vmatprep.subr.bf16.mxu0 0
    %782 = vmatpush1.bf16.msra.mxu0 0
    %783 = vmatprep.subr.bf16.mxu0 0
    %784 = vmatpush1.bf16.msra.mxu0 0
    %785 = vmatprep.subr.bf16.mxu0 0
    %786 = vmatpush1.bf16.msra.mxu0 0
    %787 = vmatprep.subr.bf16.mxu0 0
    %788 = vmatpush1.bf16.msra.mxu0 0
    %789 = vmatprep.mubr.bf16.mxu0 0
    %790 = vmatmul.mubr.bf16.gmra.mrb[0].mxu0 %v755
    %v791 = vpop.f32.mrb[0].mxu0
    %v792 = vadd.f32 0.0, %v791
    %v793 = vpop.f32.mrb[0].mxu0
    %v794 = vpop.f32.mrb[0].mxu0
    %v795 = vpop.f32.mrb[0].mxu0
    %796 = vdwg.mxu0
    %v797 = vadd.f32 %v749, %v792
    %v798 = vtanh.pop %v797
    %v799 = vmul.f32 %v245, %v798
    %v800 = vadd.f32 %v799, %v246
    %v801 = vmul.f32 %v800, %v737
    %803 = vrot.lane.b32.xlu0 %v800, 64
    %v804 = vpop.permute.xlu0 %803
    %v806 = vmul.f32 %v800, %v804
    %808 = vrot.lane.b32.xlu0 %v806, 32
    %v809 = vpop.permute.xlu0 %808
    %v811 = vadd.f32 %v801, %v809
    %v812 = vtanh.pop %v811
    %814 = vrot.lane.b32.xlu0 %v812, 64
    %v815 = vpop.permute.xlu0 %814
    %v817 = vmul.f32 %v800, %v815
    %819 = vrot.lane.b32.xlu0 %v817, 32
    %v820 = vpop.permute.xlu0 %819
    %822 = vst.msk [vmem:[#allocation2 + $0x28] sm:$0xff] %vm236, %v820
    %v823 = vld [vmem:[#allocation3 + $0x30] sm:$0xff]
    %v824 = vpack.c.bf16 %v817, %v817
    %826 = vrot.lane.b32.xlu0 %v824, 32
    %v827 = vpop.permute.xlu0 %826
    %v829 = vsel %vm236, %v827, 0
    %831 = vmatprep.subr.bf16.mxu0 0
    %832 = vmatpush1.bf16.msra.mxu0 %v380
    %833 = vmatprep.subr.bf16.mxu0 0
    %834 = vmatpush1.bf16.msra.mxu0 %v381
    %835 = vmatprep.subr.bf16.mxu0 0
    %836 = vmatpush1.bf16.msra.mxu0 0
    %837 = vmatprep.subr.bf16.mxu0 0
    %838 = vmatpush1.bf16.msra.mxu0 0
    %839 = vmatprep.subr.bf16.mxu0 0
    %840 = vmatpush1.bf16.msra.mxu0 0
    %841 = vmatprep.subr.bf16.mxu0 0
    %842 = vmatpush1.bf16.msra.mxu0 0
    %843 = vmatprep.subr.bf16.mxu0 0
    %844 = vmatpush1.bf16.msra.mxu0 0
    %845 = vmatprep.subr.bf16.mxu0 0
    %846 = vmatpush1.bf16.msra.mxu0 0
    %847 = vmatprep.subr.bf16.mxu0 0
    %848 = vmatpush1.bf16.msra.mxu0 0
    %849 = vmatprep.subr.bf16.mxu0 0
    %850 = vmatpush1.bf16.msra.mxu0 0
    %851 = vmatprep.subr.bf16.mxu0 0
    %852 = vmatpush1.bf16.msra.mxu0 0
    %853 = vmatprep.subr.bf16.mxu0 0
    %854 = vmatpush1.bf16.msra.mxu0 0
    %855 = vmatprep.subr.bf16.mxu0 0
    %856 = vmatpush1.bf16.msra.mxu0 0
    %857 = vmatprep.subr.bf16.mxu0 0
    %858 = vmatpush1.bf16.msra.mxu0 0
    %859 = vmatprep.subr.bf16.mxu0 0
    %860 = vmatpush1.bf16.msra.mxu0 0
    %861 = vmatprep.subr.bf16.mxu0 0
    %862 = vmatpush1.bf16.msra.mxu0 0
    %863 = vmatprep.mubr.bf16.mxu0 0
    %864 = vmatmul.mubr.bf16.gmra.mrb[0].mxu0 %v829
    %v865 = vpop.f32.mrb[0].mxu0
    %v866 = vadd.f32 0.0, %v865
    %v867 = vpop.f32.mrb[0].mxu0
    %v868 = vpop.f32.mrb[0].mxu0
    %v869 = vpop.f32.mrb[0].mxu0
    %870 = vdwg.mxu0
    %v871 = vadd.f32 %v823, %v866
    %v872 = vtanh.pop %v871
    %v873 = vmul.f32 %v245, %v872
    %v874 = vadd.f32 %v873, %v246
    %v875 = vmul.f32 %v874, %v811
    %877 = vrot.lane.b32.xlu0 %v874, 64
    %v878 = vpop.permute.xlu0 %877
    %v880 = vmul.f32 %v874, %v878
    %882 = vrot.lane.b32.xlu0 %v880, 32
    %v883 = vpop.permute.xlu0 %882
    %v885 = vadd.f32 %v875, %v883
    %v886 = vtanh.pop %v885
    %888 = vrot.lane.b32.xlu0 %v886, 64
    %v889 = vpop.permute.xlu0 %888
    %v891 = vmul.f32 %v874, %v889
    %893 = vrot.lane.b32.xlu0 %v891, 32
    %v894 = vpop.permute.xlu0 %893
    %896 = vst.msk [vmem:[#allocation2 + $0x30] sm:$0xff] %vm236, %v894
    %v897 = vld [vmem:[#allocation3 + $0x38] sm:$0xff]
    %v898 = vpack.c.bf16 %v891, %v891
    %900 = vrot.lane.b32.xlu0 %v898, 32
    %v901 = vpop.permute.xlu0 %900
    %v903 = vsel %vm236, %v901, 0
    %905 = vmatprep.subr.bf16.mxu0 0
    %906 = vmatpush1.bf16.msra.mxu0 %v380
    %907 = vmatprep.subr.bf16.mxu0 0
    %908 = vmatpush1.bf16.msra.mxu0 %v381
    %909 = vmatprep.subr.bf16.mxu0 0
    %910 = vmatpush1.bf16.msra.mxu0 0
    %911 = vmatprep.subr.bf16.mxu0 0
    %912 = vmatpush1.bf16.msra.mxu0 0
    %913 = vmatprep.subr.bf16.mxu0 0
    %914 = vmatpush1.bf16.msra.mxu0 0
    %915 = vmatprep.subr.bf16.mxu0 0
    %916 = vmatpush1.bf16.msra.mxu0 0
    %917 = vmatprep.subr.bf16.mxu0 0
    %918 = vmatpush1.bf16.msra.mxu0 0
    %919 = vmatprep.subr.bf16.mxu0 0
    %920 = vmatpush1.bf16.msra.mxu0 0
    %921 = vmatprep.subr.bf16.mxu0 0
    %922 = vmatpush1.bf16.msra.mxu0 0
    %923 = vmatprep.subr.bf16.mxu0 0
    %924 = vmatpush1.bf16.msra.mxu0 0
    %925 = vmatprep.subr.bf16.mxu0 0
    %926 = vmatpush1.bf16.msra.mxu0 0
    %927 = vmatprep.subr.bf16.mxu0 0
    %928 = vmatpush1.bf16.msra.mxu0 0
    %929 = vmatprep.subr.bf16.mxu0 0
    %930 = vmatpush1.bf16.msra.mxu0 0
    %931 = vmatprep.subr.bf16.mxu0 0
    %932 = vmatpush1.bf16.msra.mxu0 0
    %933 = vmatprep.subr.bf16.mxu0 0
    %934 = vmatpush1.bf16.msra.mxu0 0
    %935 = vmatprep.subr.bf16.mxu0 0
    %936 = vmatpush1.bf16.msra.mxu0 0
    %937 = vmatprep.mubr.bf16.mxu0 0
    %938 = vmatmul.mubr.bf16.gmra.mrb[0].mxu0 %v903
    %v939 = vpop.f32.mrb[0].mxu0
    %v940 = vadd.f32 0.0, %v939
    %v941 = vpop.f32.mrb[0].mxu0
    %v942 = vpop.f32.mrb[0].mxu0
    %v943 = vpop.f32.mrb[0].mxu0
    %944 = vdwg.mxu0
    %v945 = vadd.f32 %v897, %v940
    %v946 = vtanh.pop %v945
    %v947 = vmul.f32 %v245, %v946
    %v948 = vadd.f32 %v947, %v246
    %v949 = vmul.f32 %v948, %v885
    %951 = vrot.lane.b32.xlu0 %v948, 64
    %v952 = vpop.permute.xlu0 %951
    %v954 = vmul.f32 %v948, %v952
    %956 = vrot.lane.b32.xlu0 %v954, 32
    %v957 = vpop.permute.xlu0 %956
    %v959 = vadd.f32 %v949, %v957
    %v960 = vtanh.pop %v959
    %962 = vrot.lane.b32.xlu0 %v960, 64
    %v963 = vpop.permute.xlu0 %962
    %v965 = vmul.f32 %v948, %v963
    %967 = vrot.lane.b32.xlu0 %v965, 32
    %v968 = vpop.permute.xlu0 %967
    %970 = vst.msk [vmem:[#allocation2 + $0x38] sm:$0xff] %vm236, %v968
    %v971 = vld [vmem:[%s8] sm:$0xf]
    %v972 = vld [vmem:[%s8 + $0x4] sm:$0xf]
    %v973 = vld [vmem:[%s8 + $0x8] sm:$0xf]
    %v974 = vld [vmem:[%s8 + $0xc] sm:$0xf]
    %v975 = vld [vmem:[%s9] sm:$0xf]
    %v976 = vld [vmem:[%s9 + $0x4] sm:$0xf]
    %v977 = vld [vmem:[%s9 + $0x8] sm:$0xf]
    %v978 = vld [vmem:[%s9 + $0xc] sm:$0xf]
    %v979 = vld [vmem:[%s10] sm:$0x1]
    %v980 = vld [vmem:[#allocation2] sm:$0xff]
    %v981 = vld [vmem:[#allocation2 + $0x8] sm:$0xff]
    %v982 = vld [vmem:[#allocation2 + $0x10] sm:$0xff]
    %v983 = vld [vmem:[#allocation2 + $0x18] sm:$0xff]
    %v984 = vld [vmem:[#allocation2 + $0x20] sm:$0xff]
    %v985 = vld [vmem:[#allocation2 + $0x28] sm:$0xff]
    %v986 = vld [vmem:[#allocation2 + $0x30] sm:$0xff]
    %v987 = vld [vmem:[#allocation2 + $0x38] sm:$0xff]
    %v988 = vpack.c.bf16 %v981, %v980
    %v989 = vpack.c.bf16 %v983, %v982
    %v990 = vpack.c.bf16 %v985, %v984
    %v991 = vpack.c.bf16 %v987, %v986
    %v993 = vlaneseq
    %v994 = vshrl.u32 %v993, 7
    %v995 = vsub.s32 0, %v994
    %v996 = vrot.slane %v979, %v995
    %v1002 = vunpack.c.l.b16 %v971
    %v1003 = vunpack.c.l.b16 %v972
    %v1004 = vunpack.c.l.b16 %v973
    %v1005 = vunpack.c.l.b16 %v974
    %v1006 = vpack.c.b16 %v1003, %v1002
    %v1007 = vpack.c.b16 %v1005, %v1004
    %v1011 = vsel %vm236, %v988, 0
    %v1014 = vsel %vm236, %v989, 0
    %v1017 = vsel %vm236, %v990, 0
    %v1020 = vsel %vm236, %v991, 0
    %1022 = vmatprep.subr.bf16.mxu0 0
    %1023 = vmatpush1.bf16.msra.mxu0 %v1006
    %1024 = vmatprep.subr.bf16.mxu0 0
    %1025 = vmatpush1.bf16.msra.mxu0 %v1007
    %1026 = vmatprep.subr.bf16.mxu0 0
    %1027 = vmatpush1.bf16.msra.mxu0 0
    %1028 = vmatprep.subr.bf16.mxu0 0
    %1029 = vmatpush1.bf16.msra.mxu0 0
    %1030 = vmatprep.subr.bf16.mxu0 0
    %1031 = vmatpush1.bf16.msra.mxu0 0
    %1032 = vmatprep.subr.bf16.mxu0 0
    %1033 = vmatpush1.bf16.msra.mxu0 0
    %1034 = vmatprep.subr.bf16.mxu0 0
    %1035 = vmatpush1.bf16.msra.mxu0 0
    %1036 = vmatprep.subr.bf16.mxu0 0
    %1037 = vmatpush1.bf16.msra.mxu0 0
    %1038 = vmatprep.subr.bf16.mxu0 0
    %1039 = vmatpush1.bf16.msra.mxu0 0
    %1040 = vmatprep.subr.bf16.mxu0 0
    %1041 = vmatpush1.bf16.msra.mxu0 0
    %1042 = vmatprep.subr.bf16.mxu0 0
    %1043 = vmatpush1.bf16.msra.mxu0 0
    %1044 = vmatprep.subr.bf16.mxu0 0
    %1045 = vmatpush1.bf16.msra.mxu0 0
    %1046 = vmatprep.subr.bf16.mxu0 0
    %1047 = vmatpush1.bf16.msra.mxu0 0
    %1048 = vmatprep.subr.bf16.mxu0 0
    %1049 = vmatpush1.bf16.msra.mxu0 0
    %1050 = vmatprep.subr.bf16.mxu0 0
    %1051 = vmatpush1.bf16.msra.mxu0 0
    %1052 = vmatprep.subr.bf16.mxu0 0
    %1053 = vmatpush1.bf16.msra.mxu0 0
    %1054 = vmatprep.mubr.bf16.mxu0 0
    %1055 = vmatmul.mubr.bf16.gmra.mrb[0].mxu0 %v1011
    %v1056 = vpop.f32.mrb[0].mxu0
    %v1057 = vadd.f32 %v996, %v1056
    %v1058 = vpop.f32.mrb[0].mxu0
    %v1059 = vpop.f32.mrb[0].mxu0
    %v1060 = vadd.f32 %v996, %v1059
    %v1061 = vpop.f32.mrb[0].mxu0
    %1062 = vmatprep.mubr.bf16.mxu0 0
    %1063 = vmatmul.mubr.bf16.gmra.mrb[0].mxu0 %v1014
    %v1064 = vpop.f32.mrb[0].mxu0
    %v1065 = vadd.f32 %v996, %v1064
    %v1066 = vpop.f32.mrb[0].mxu0
    %v1067 = vpop.f32.mrb[0].mxu0
    %v1068 = vadd.f32 %v996, %v1067
    %v1069 = vpop.f32.mrb[0].mxu0
    %1070 = vmatprep.mubr.bf16.mxu0 0
    %1071 = vmatmul.mubr.bf16.gmra.mrb[0].mxu0 %v1017
    %v1072 = vpop.f32.mrb[0].mxu0
    %v1073 = vadd.f32 %v996, %v1072
    %v1074 = vpop.f32.mrb[0].mxu0
    %v1075 = vpop.f32.mrb[0].mxu0
    %v1076 = vadd.f32 %v996, %v1075
    %v1077 = vpop.f32.mrb[0].mxu0
    %1078 = vmatprep.mubr.bf16.mxu0 0
    %1079 = vmatmul.mubr.bf16.gmra.mrb[0].mxu0 %v1020
    %v1080 = vpop.f32.mrb[0].mxu0
    %v1081 = vadd.f32 %v996, %v1080
    %v1082 = vpop.f32.mrb[0].mxu0
    %v1083 = vpop.f32.mrb[0].mxu0
    %v1084 = vadd.f32 %v996, %v1083
    %v1085 = vpop.f32.mrb[0].mxu0
    %1086 = vdwg.mxu0
    %1087 = vst [vmem:[#allocation3] sm:$0xff] %v1057
    %1088 = vst [vmem:[#allocation3 + $0x8] sm:$0xff] %v1060
    %1089 = vst [vmem:[#allocation3 + $0x10] sm:$0xff] %v1065
    %1090 = vst [vmem:[#allocation3 + $0x18] sm:$0xff] %v1068
    %1091 = vst [vmem:[#allocation3 + $0x20] sm:$0xff] %v1073
    %1092 = vst [vmem:[#allocation3 + $0x28] sm:$0xff] %v1076
    %1093 = vst [vmem:[#allocation3 + $0x30] sm:$0xff] %v1081
    %1094 = vst [vmem:[#allocation3 + $0x38] sm:$0xff] %v1084
    %v1095 = vld [vmem:[#allocation3] sm:$0xff]
    %v1100 = vunpack.c.l.b16 %v975
    %v1101 = vunpack.c.l.b16 %v976
    %v1102 = vunpack.c.l.b16 %v977
    %v1103 = vunpack.c.l.b16 %v978
    %v1104 = vpack.c.b16 %v1101, %v1100
    %v1105 = vpack.c.b16 %v1103, %v1102
    %1108 = vmatprep.subr.bf16.mxu0 0
    %1109 = vmatpush1.bf16.msra.mxu0 %v1104
    %1110 = vmatprep.subr.bf16.mxu0 0
    %1111 = vmatpush1.bf16.msra.mxu0 %v1105
    %1112 = vmatprep.subr.bf16.mxu0 0
    %1113 = vmatpush1.bf16.msra.mxu0 0
    %1114 = vmatprep.subr.bf16.mxu0 0
    %1115 = vmatpush1.bf16.msra.mxu0 0
    %1116 = vmatprep.subr.bf16.mxu0 0
    %1117 = vmatpush1.bf16.msra.mxu0 0
    %1118 = vmatprep.subr.bf16.mxu0 0
    %1119 = vmatpush1.bf16.msra.mxu0 0
    %1120 = vmatprep.subr.bf16.mxu0 0
    %1121 = vmatpush1.bf16.msra.mxu0 0
    %1122 = vmatprep.subr.bf16.mxu0 0
    %1123 = vmatpush1.bf16.msra.mxu0 0
    %1124 = vmatprep.subr.bf16.mxu0 0
    %1125 = vmatpush1.bf16.msra.mxu0 0
    %1126 = vmatprep.subr.bf16.mxu0 0
    %1127 = vmatpush1.bf16.msra.mxu0 0
    %1128 = vmatprep.subr.bf16.mxu0 0
    %1129 = vmatpush1.bf16.msra.mxu0 0
    %1130 = vmatprep.subr.bf16.mxu0 0
    %1131 = vmatpush1.bf16.msra.mxu0 0
    %1132 = vmatprep.subr.bf16.mxu0 0
    %1133 = vmatpush1.bf16.msra.mxu0 0
    %1134 = vmatprep.subr.bf16.mxu0 0
    %1135 = vmatpush1.bf16.msra.mxu0 0
    %1136 = vmatprep.subr.bf16.mxu0 0
    %1137 = vmatpush1.bf16.msra.mxu0 0
    %1138 = vmatprep.subr.bf16.mxu0 0
    %1139 = vmatpush1.bf16.msra.mxu0 0
    %1140 = vmatprep.mubr.bf16.mxu0 0
    %1141 = vmatmul.mubr.bf16.gmra.mrb[0].mxu0 %v385
    %v1142 = vpop.f32.mrb[0].mxu0
    %v1143 = vadd.f32 0.0, %v1142
    %v1144 = vpop.f32.mrb[0].mxu0
    %v1145 = vpop.f32.mrb[0].mxu0
    %v1146 = vpop.f32.mrb[0].mxu0
    %1147 = vdwg.mxu0
    %v1148 = vadd.f32 %v1095, %v1143
    %v1149 = vtanh.pop %v1148
    %v1150 = vmul.f32 %v245, %v1149
    %v1151 = vadd.f32 %v1150, %v246
    %v1152 = vmul.f32 %v1151, 0.0
    %1154 = vrot.lane.b32.xlu0 %v1151, 64
    %v1155 = vpop.permute.xlu0 %1154
    %v1157 = vmul.f32 %v1151, %v1155
    %1159 = vrot.lane.b32.xlu0 %v1157, 32
    %v1160 = vpop.permute.xlu0 %1159
    %v1162 = vadd.f32 %v1152, %v1160
    %v1163 = vtanh.pop %v1162
    %1165 = vrot.lane.b32.xlu0 %v1163, 64
    %v1166 = vpop.permute.xlu0 %1165
    %v1168 = vmul.f32 %v1151, %v1166
    %1170 = vrot.lane.b32.xlu0 %v1168, 32
    %v1171 = vpop.permute.xlu0 %1170
    %1173 = vst.msk [vmem:[#allocation2] sm:$0xff] %vm236, %v1171
    %v1174 = vld [vmem:[#allocation3 + $0x8] sm:$0xff]
    %v1175 = vpack.c.bf16 %v1168, %v1168
    %1177 = vrot.lane.b32.xlu0 %v1175, 32
    %v1178 = vpop.permute.xlu0 %1177
    %v1180 = vsel %vm236, %v1178, 0
    %1182 = vmatprep.subr.bf16.mxu0 0
    %1183 = vmatpush1.bf16.msra.mxu0 %v1104
    %1184 = vmatprep.subr.bf16.mxu0 0
    %1185 = vmatpush1.bf16.msra.mxu0 %v1105
    %1186 = vmatprep.subr.bf16.mxu0 0
    %1187 = vmatpush1.bf16.msra.mxu0 0
    %1188 = vmatprep.subr.bf16.mxu0 0
    %1189 = vmatpush1.bf16.msra.mxu0 0
    %1190 = vmatprep.subr.bf16.mxu0 0
    %1191 = vmatpush1.bf16.msra.mxu0 0
    %1192 = vmatprep.subr.bf16.mxu0 0
    %1193 = vmatpush1.bf16.msra.mxu0 0
    %1194 = vmatprep.subr.bf16.mxu0 0
    %1195 = vmatpush1.bf16.msra.mxu0 0
    %1196 = vmatprep.subr.bf16.mxu0 0
    %1197 = vmatpush1.bf16.msra.mxu0 0
    %1198 = vmatprep.subr.bf16.mxu0 0
    %1199 = vmatpush1.bf16.msra.mxu0 0
    %1200 = vmatprep.subr.bf16.mxu0 0
    %1201 = vmatpush1.bf16.msra.mxu0 0
    %1202 = vmatprep.subr.bf16.mxu0 0
    %1203 = vmatpush1.bf16.msra.mxu0 0
    %1204 = vmatprep.subr.bf16.mxu0 0
    %1205 = vmatpush1.bf16.msra.mxu0 0
    %1206 = vmatprep.subr.bf16.mxu0 0
    %1207 = vmatpush1.bf16.msra.mxu0 0
    %1208 = vmatprep.subr.bf16.mxu0 0
    %1209 = vmatpush1.bf16.msra.mxu0 0
    %1210 = vmatprep.subr.bf16.mxu0 0
    %1211 = vmatpush1.bf16.msra.mxu0 0
    %1212 = vmatprep.subr.bf16.mxu0 0
    %1213 = vmatpush1.bf16.msra.mxu0 0
    %1214 = vmatprep.mubr.bf16.mxu0 0
    %1215 = vmatmul.mubr.bf16.gmra.mrb[0].mxu0 %v1180
    %v1216 = vpop.f32.mrb[0].mxu0
    %v1217 = vadd.f32 0.0, %v1216
    %v1218 = vpop.f32.mrb[0].mxu0
    %v1219 = vpop.f32.mrb[0].mxu0
    %v1220 = vpop.f32.mrb[0].mxu0
    %1221 = vdwg.mxu0
    %v1222 = vadd.f32 %v1174, %v1217
    %v1223 = vtanh.pop %v1222
    %v1224 = vmul.f32 %v245, %v1223
    %v1225 = vadd.f32 %v1224, %v246
    %v1226 = vmul.f32 %v1225, %v1162
    %1228 = vrot.lane.b32.xlu0 %v1225, 64
    %v1229 = vpop.permute.xlu0 %1228
    %v1231 = vmul.f32 %v1225, %v1229
    %1233 = vrot.lane.b32.xlu0 %v1231, 32
    %v1234 = vpop.permute.xlu0 %1233
    %v1236 = vadd.f32 %v1226, %v1234
    %v1237 = vtanh.pop %v1236
    %1239 = vrot.lane.b32.xlu0 %v1237, 64
    %v1240 = vpop.permute.xlu0 %1239
    %v1242 = vmul.f32 %v1225, %v1240
    %1244 = vrot.lane.b32.xlu0 %v1242, 32
    %v1245 = vpop.permute.xlu0 %1244
    %1247 = vst.msk [vmem:[#allocation2 + $0x8] sm:$0xff] %vm236, %v1245
    %v1248 = vld [vmem:[#allocation3 + $0x10] sm:$0xff]
    %v1249 = vpack.c.bf16 %v1242, %v1242
    %1251 = vrot.lane.b32.xlu0 %v1249, 32
    %v1252 = vpop.permute.xlu0 %1251
    %v1254 = vsel %vm236, %v1252, 0
    %1256 = vmatprep.subr.bf16.mxu0 0
    %1257 = vmatpush1.bf16.msra.mxu0 %v1104
    %1258 = vmatprep.subr.bf16.mxu0 0
    %1259 = vmatpush1.bf16.msra.mxu0 %v1105
    %1260 = vmatprep.subr.bf16.mxu0 0
    %1261 = vmatpush1.bf16.msra.mxu0 0
    %1262 = vmatprep.subr.bf16.mxu0 0
    %1263 = vmatpush1.bf16.msra.mxu0 0
    %1264 = vmatprep.subr.bf16.mxu0 0
    %1265 = vmatpush1.bf16.msra.mxu0 0
    %1266 = vmatprep.subr.bf16.mxu0 0
    %1267 = vmatpush1.bf16.msra.mxu0 0
    %1268 = vmatprep.subr.bf16.mxu0 0
    %1269 = vmatpush1.bf16.msra.mxu0 0
    %1270 = vmatprep.subr.bf16.mxu0 0
    %1271 = vmatpush1.bf16.msra.mxu0 0
    %1272 = vmatprep.subr.bf16.mxu0 0
    %1273 = vmatpush1.bf16.msra.mxu0 0
    %1274 = vmatprep.subr.bf16.mxu0 0
    %1275 = vmatpush1.bf16.msra.mxu0 0
    %1276 = vmatprep.subr.bf16.mxu0 0
    %1277 = vmatpush1.bf16.msra.mxu0 0
    %1278 = vmatprep.subr.bf16.mxu0 0
    %1279 = vmatpush1.bf16.msra.mxu0 0
    %1280 = vmatprep.subr.bf16.mxu0 0
    %1281 = vmatpush1.bf16.msra.mxu0 0
    %1282 = vmatprep.subr.bf16.mxu0 0
    %1283 = vmatpush1.bf16.msra.mxu0 0
    %1284 = vmatprep.subr.bf16.mxu0 0
    %1285 = vmatpush1.bf16.msra.mxu0 0
    %1286 = vmatprep.subr.bf16.mxu0 0
    %1287 = vmatpush1.bf16.msra.mxu0 0
    %1288 = vmatprep.mubr.bf16.mxu0 0
    %1289 = vmatmul.mubr.bf16.gmra.mrb[0].mxu0 %v1254
    %v1290 = vpop.f32.mrb[0].mxu0
    %v1291 = vadd.f32 0.0, %v1290
    %v1292 = vpop.f32.mrb[0].mxu0
    %v1293 = vpop.f32.mrb[0].mxu0
    %v1294 = vpop.f32.mrb[0].mxu0
    %1295 = vdwg.mxu0
    %v1296 = vadd.f32 %v1248, %v1291
    %v1297 = vtanh.pop %v1296
    %v1298 = vmul.f32 %v245, %v1297
    %v1299 = vadd.f32 %v1298, %v246
    %v1300 = vmul.f32 %v1299, %v1236
    %1302 = vrot.lane.b32.xlu0 %v1299, 64
    %v1303 = vpop.permute.xlu0 %1302
    %v1305 = vmul.f32 %v1299, %v1303
    %1307 = vrot.lane.b32.xlu0 %v1305, 32
    %v1308 = vpop.permute.xlu0 %1307
    %v1310 = vadd.f32 %v1300, %v1308
    %v1311 = vtanh.pop %v1310
    %1313 = vrot.lane.b32.xlu0 %v1311, 64
    %v1314 = vpop.permute.xlu0 %1313
    %v1316 = vmul.f32 %v1299, %v1314
    %1318 = vrot.lane.b32.xlu0 %v1316, 32
    %v1319 = vpop.permute.xlu0 %1318
    %1321 = vst.msk [vmem:[#allocation2 + $0x10] sm:$0xff] %vm236, %v1319
    %v1322 = vld [vmem:[#allocation3 + $0x18] sm:$0xff]
    %v1323 = vpack.c.bf16 %v1316, %v1316
    %1325 = vrot.lane.b32.xlu0 %v1323, 32
    %v1326 = vpop.permute.xlu0 %1325
    %v1328 = vsel %vm236, %v1326, 0
    %1330 = vmatprep.subr.bf16.mxu0 0
    %1331 = vmatpush1.bf16.msra.mxu0 %v1104
    %1332 = vmatprep.subr.bf16.mxu0 0
    %1333 = vmatpush1.bf16.msra.mxu0 %v1105
    %1334 = vmatprep.subr.bf16.mxu0 0
    %1335 = vmatpush1.bf16.msra.mxu0 0
    %1336 = vmatprep.subr.bf16.mxu0 0
    %1337 = vmatpush1.bf16.msra.mxu0 0
    %1338 = vmatprep.subr.bf16.mxu0 0
    %1339 = vmatpush1.bf16.msra.mxu0 0
    %1340 = vmatprep.subr.bf16.mxu0 0
    %1341 = vmatpush1.bf16.msra.mxu0 0
    %1342 = vmatprep.subr.bf16.mxu0 0
    %1343 = vmatpush1.bf16.msra.mxu0 0
    %1344 = vmatprep.subr.bf16.mxu0 0
    %1345 = vmatpush1.bf16.msra.mxu0 0
    %1346 = vmatprep.subr.bf16.mxu0 0
    %1347 = vmatpush1.bf16.msra.mxu0 0
    %1348 = vmatprep.subr.bf16.mxu0 0
    %1349 = vmatpush1.bf16.msra.mxu0 0
    %1350 = vmatprep.subr.bf16.mxu0 0
    %1351 = vmatpush1.bf16.msra.mxu0 0
    %1352 = vmatprep.subr.bf16.mxu0 0
    %1353 = vmatpush1.bf16.msra.mxu0 0
    %1354 = vmatprep.subr.bf16.mxu0 0
    %1355 = vmatpush1.bf16.msra.mxu0 0
    %1356 = vmatprep.subr.bf16.mxu0 0
    %1357 = vmatpush1.bf16.msra.mxu0 0
    %1358 = vmatprep.subr.bf16.mxu0 0
    %1359 = vmatpush1.bf16.msra.mxu0 0
    %1360 = vmatprep.subr.bf16.mxu0 0
    %1361 = vmatpush1.bf16.msra.mxu0 0
    %1362 = vmatprep.mubr.bf16.mxu0 0
    %1363 = vmatmul.mubr.bf16.gmra.mrb[0].mxu0 %v1328
    %v1364 = vpop.f32.mrb[0].mxu0
    %v1365 = vadd.f32 0.0, %v1364
    %v1366 = vpop.f32.mrb[0].mxu0
    %v1367 = vpop.f32.mrb[0].mxu0
    %v1368 = vpop.f32.mrb[0].mxu0
    %1369 = vdwg.mxu0
    %v1370 = vadd.f32 %v1322, %v1365
    %v1371 = vtanh.pop %v1370
    %v1372 = vmul.f32 %v245, %v1371
    %v1373 = vadd.f32 %v1372, %v246
    %v1374 = vmul.f32 %v1373, %v1310
    %1376 = vrot.lane.b32.xlu0 %v1373, 64
    %v1377 = vpop.permute.xlu0 %1376
    %v1379 = vmul.f32 %v1373, %v1377
    %1381 = vrot.lane.b32.xlu0 %v1379, 32
    %v1382 = vpop.permute.xlu0 %1381
    %v1384 = vadd.f32 %v1374, %v1382
    %v1385 = vtanh.pop %v1384
    %1387 = vrot.lane.b32.xlu0 %v1385, 64
    %v1388 = vpop.permute.xlu0 %1387
    %v1390 = vmul.f32 %v1373, %v1388
    %1392 = vrot.lane.b32.xlu0 %v1390, 32
    %v1393 = vpop.permute.xlu0 %1392
    %1395 = vst.msk [vmem:[#allocation2 + $0x18] sm:$0xff] %vm236, %v1393
    %v1396 = vld [vmem:[#allocation3 + $0x20] sm:$0xff]
    %v1397 = vpack.c.bf16 %v1390, %v1390
    %1399 = vrot.lane.b32.xlu0 %v1397, 32
    %v1400 = vpop.permute.xlu0 %1399
    %v1402 = vsel %vm236, %v1400, 0
    %1404 = vmatprep.subr.bf16.mxu0 0
    %1405 = vmatpush1.bf16.msra.mxu0 %v1104
    %1406 = vmatprep.subr.bf16.mxu0 0
    %1407 = vmatpush1.bf16.msra.mxu0 %v1105
    %1408 = vmatprep.subr.bf16.mxu0 0
    %1409 = vmatpush1.bf16.msra.mxu0 0
    %1410 = vmatprep.subr.bf16.mxu0 0
    %1411 = vmatpush1.bf16.msra.mxu0 0
    %1412 = vmatprep.subr.bf16.mxu0 0
    %1413 = vmatpush1.bf16.msra.mxu0 0
    %1414 = vmatprep.subr.bf16.mxu0 0
    %1415 = vmatpush1.bf16.msra.mxu0 0
    %1416 = vmatprep.subr.bf16.mxu0 0
    %1417 = vmatpush1.bf16.msra.mxu0 0
    %1418 = vmatprep.subr.bf16.mxu0 0
    %1419 = vmatpush1.bf16.msra.mxu0 0
    %1420 = vmatprep.subr.bf16.mxu0 0
    %1421 = vmatpush1.bf16.msra.mxu0 0
    %1422 = vmatprep.subr.bf16.mxu0 0
    %1423 = vmatpush1.bf16.msra.mxu0 0
    %1424 = vmatprep.subr.bf16.mxu0 0
    %1425 = vmatpush1.bf16.msra.mxu0 0
    %1426 = vmatprep.subr.bf16.mxu0 0
    %1427 = vmatpush1.bf16.msra.mxu0 0
    %1428 = vmatprep.subr.bf16.mxu0 0
    %1429 = vmatpush1.bf16.msra.mxu0 0
    %1430 = vmatprep.subr.bf16.mxu0 0
    %1431 = vmatpush1.bf16.msra.mxu0 0
    %1432 = vmatprep.subr.bf16.mxu0 0
    %1433 = vmatpush1.bf16.msra.mxu0 0
    %1434 = vmatprep.subr.bf16.mxu0 0
    %1435 = vmatpush1.bf16.msra.mxu0 0
    %1436 = vmatprep.mubr.bf16.mxu0 0
    %1437 = vmatmul.mubr.bf16.gmra.mrb[0].mxu0 %v1402
    %v1438 = vpop.f32.mrb[0].mxu0
    %v1439 = vadd.f32 0.0, %v1438
    %v1440 = vpop.f32.mrb[0].mxu0
    %v1441 = vpop.f32.mrb[0].mxu0
    %v1442 = vpop.f32.mrb[0].mxu0
    %1443 = vdwg.mxu0
    %v1444 = vadd.f32 %v1396, %v1439
    %v1445 = vtanh.pop %v1444
    %v1446 = vmul.f32 %v245, %v1445
    %v1447 = vadd.f32 %v1446, %v246
    %v1448 = vmul.f32 %v1447, %v1384
    %1450 = vrot.lane.b32.xlu0 %v1447, 64
    %v1451 = vpop.permute.xlu0 %1450
    %v1453 = vmul.f32 %v1447, %v1451
    %1455 = vrot.lane.b32.xlu0 %v1453, 32
    %v1456 = vpop.permute.xlu0 %1455
    %v1458 = vadd.f32 %v1448, %v1456
    %v1459 = vtanh.pop %v1458
    %1461 = vrot.lane.b32.xlu0 %v1459, 64
    %v1462 = vpop.permute.xlu0 %1461
    %v1464 = vmul.f32 %v1447, %v1462
    %1466 = vrot.lane.b32.xlu0 %v1464, 32
    %v1467 = vpop.permute.xlu0 %1466
    %1469 = vst.msk [vmem:[#allocation2 + $0x20] sm:$0xff] %vm236, %v1467
    %v1470 = vld [vmem:[#allocation3 + $0x28] sm:$0xff]
    %v1471 = vpack.c.bf16 %v1464, %v1464
    %1473 = vrot.lane.b32.xlu0 %v1471, 32
    %v1474 = vpop.permute.xlu0 %1473
    %v1476 = vsel %vm236, %v1474, 0
    %1478 = vmatprep.subr.bf16.mxu0 0
    %1479 = vmatpush1.bf16.msra.mxu0 %v1104
    %1480 = vmatprep.subr.bf16.mxu0 0
    %1481 = vmatpush1.bf16.msra.mxu0 %v1105
    %1482 = vmatprep.subr.bf16.mxu0 0
    %1483 = vmatpush1.bf16.msra.mxu0 0
    %1484 = vmatprep.subr.bf16.mxu0 0
    %1485 = vmatpush1.bf16.msra.mxu0 0
    %1486 = vmatprep.subr.bf16.mxu0 0
    %1487 = vmatpush1.bf16.msra.mxu0 0
    %1488 = vmatprep.subr.bf16.mxu0 0
    %1489 = vmatpush1.bf16.msra.mxu0 0
    %1490 = vmatprep.subr.bf16.mxu0 0
    %1491 = vmatpush1.bf16.msra.mxu0 0
    %1492 = vmatprep.subr.bf16.mxu0 0
    %1493 = vmatpush1.bf16.msra.mxu0 0
    %1494 = vmatprep.subr.bf16.mxu0 0
    %1495 = vmatpush1.bf16.msra.mxu0 0
    %1496 = vmatprep.subr.bf16.mxu0 0
    %1497 = vmatpush1.bf16.msra.mxu0 0
    %1498 = vmatprep.subr.bf16.mxu0 0
    %1499 = vmatpush1.bf16.msra.mxu0 0
    %1500 = vmatprep.subr.bf16.mxu0 0
    %1501 = vmatpush1.bf16.msra.mxu0 0
    %1502 = vmatprep.subr.bf16.mxu0 0
    %1503 = vmatpush1.bf16.msra.mxu0 0
    %1504 = vmatprep.subr.bf16.mxu0 0
    %1505 = vmatpush1.bf16.msra.mxu0 0
    %1506 = vmatprep.subr.bf16.mxu0 0
    %1507 = vmatpush1.bf16.msra.mxu0 0
    %1508 = vmatprep.subr.bf16.mxu0 0
    %1509 = vmatpush1.bf16.msra.mxu0 0
    %1510 = vmatprep.mubr.bf16.mxu0 0
    %1511 = vmatmul.mubr.bf16.gmra.mrb[0].mxu0 %v1476
    %v1512 = vpop.f32.mrb[0].mxu0
    %v1513 = vadd.f32 0.0, %v1512
    %v1514 = vpop.f32.mrb[0].mxu0
    %v1515 = vpop.f32.mrb[0].mxu0
    %v1516 = vpop.f32.mrb[0].mxu0
    %1517 = vdwg.mxu0
    %v1518 = vadd.f32 %v1470, %v1513
    %v1519 = vtanh.pop %v1518
    %v1520 = vmul.f32 %v245, %v1519
    %v1521 = vadd.f32 %v1520, %v246
    %v1522 = vmul.f32 %v1521, %v1458
    %1524 = vrot.lane.b32.xlu0 %v1521, 64
    %v1525 = vpop.permute.xlu0 %1524
    %v1527 = vmul.f32 %v1521, %v1525
    %1529 = vrot.lane.b32.xlu0 %v1527, 32
    %v1530 = vpop.permute.xlu0 %1529
    %v1532 = vadd.f32 %v1522, %v1530
    %v1533 = vtanh.pop %v1532
    %1535 = vrot.lane.b32.xlu0 %v1533, 64
    %v1536 = vpop.permute.xlu0 %1535
    %v1538 = vmul.f32 %v1521, %v1536
    %1540 = vrot.lane.b32.xlu0 %v1538, 32
    %v1541 = vpop.permute.xlu0 %1540
    %1543 = vst.msk [vmem:[#allocation2 + $0x28] sm:$0xff] %vm236, %v1541
    %v1544 = vld [vmem:[#allocation3 + $0x30] sm:$0xff]
    %v1545 = vpack.c.bf16 %v1538, %v1538
    %1547 = vrot.lane.b32.xlu0 %v1545, 32
    %v1548 = vpop.permute.xlu0 %1547
    %v1550 = vsel %vm236, %v1548, 0
    %1552 = vmatprep.subr.bf16.mxu0 0
    %1553 = vmatpush1.bf16.msra.mxu0 %v1104
    %1554 = vmatprep.subr.bf16.mxu0 0
    %1555 = vmatpush1.bf16.msra.mxu0 %v1105
    %1556 = vmatprep.subr.bf16.mxu0 0
    %1557 = vmatpush1.bf16.msra.mxu0 0
    %1558 = vmatprep.subr.bf16.mxu0 0
    %1559 = vmatpush1.bf16.msra.mxu0 0
    %1560 = vmatprep.subr.bf16.mxu0 0
    %1561 = vmatpush1.bf16.msra.mxu0 0
    %1562 = vmatprep.subr.bf16.mxu0 0
    %1563 = vmatpush1.bf16.msra.mxu0 0
    %1564 = vmatprep.subr.bf16.mxu0 0
    %1565 = vmatpush1.bf16.msra.mxu0 0
    %1566 = vmatprep.subr.bf16.mxu0 0
    %1567 = vmatpush1.bf16.msra.mxu0 0
    %1568 = vmatprep.subr.bf16.mxu0 0
    %1569 = vmatpush1.bf16.msra.mxu0 0
    %1570 = vmatprep.subr.bf16.mxu0 0
    %1571 = vmatpush1.bf16.msra.mxu0 0
    %1572 = vmatprep.subr.bf16.mxu0 0
    %1573 = vmatpush1.bf16.msra.mxu0 0
    %1574 = vmatprep.subr.bf16.mxu0 0
    %1575 = vmatpush1.bf16.msra.mxu0 0
    %1576 = vmatprep.subr.bf16.mxu0 0
    %1577 = vmatpush1.bf16.msra.mxu0 0
    %1578 = vmatprep.subr.bf16.mxu0 0
    %1579 = vmatpush1.bf16.msra.mxu0 0
    %1580 = vmatprep.subr.bf16.mxu0 0
    %1581 = vmatpush1.bf16.msra.mxu0 0
    %1582 = vmatprep.subr.bf16.mxu0 0
    %1583 = vmatpush1.bf16.msra.mxu0 0
    %1584 = vmatprep.mubr.bf16.mxu0 0
    %1585 = vmatmul.mubr.bf16.gmra.mrb[0].mxu0 %v1550
    %v1586 = vpop.f32.mrb[0].mxu0
    %v1587 = vadd.f32 0.0, %v1586
    %v1588 = vpop.f32.mrb[0].mxu0
    %v1589 = vpop.f32.mrb[0].mxu0
    %v1590 = vpop.f32.mrb[0].mxu0
    %1591 = vdwg.mxu0
    %v1592 = vadd.f32 %v1544, %v1587
    %v1593 = vtanh.pop %v1592
    %v1594 = vmul.f32 %v245, %v1593
    %v1595 = vadd.f32 %v1594, %v246
    %v1596 = vmul.f32 %v1595, %v1532
    %1598 = vrot.lane.b32.xlu0 %v1595, 64
    %v1599 = vpop.permute.xlu0 %1598
    %v1601 = vmul.f32 %v1595, %v1599
    %1603 = vrot.lane.b32.xlu0 %v1601, 32
    %v1604 = vpop.permute.xlu0 %1603
    %v1606 = vadd.f32 %v1596, %v1604
    %v1607 = vtanh.pop %v1606
    %1609 = vrot.lane.b32.xlu0 %v1607, 64
    %v1610 = vpop.permute.xlu0 %1609
    %v1612 = vmul.f32 %v1595, %v1610
    %1614 = vrot.lane.b32.xlu0 %v1612, 32
    %v1615 = vpop.permute.xlu0 %1614
    %1617 = vst.msk [vmem:[#allocation2 + $0x30] sm:$0xff] %vm236, %v1615
    %v1618 = vld [vmem:[#allocation3 + $0x38] sm:$0xff]
    %v1619 = vpack.c.bf16 %v1612, %v1612
    %1621 = vrot.lane.b32.xlu0 %v1619, 32
    %v1622 = vpop.permute.xlu0 %1621
    %v1624 = vsel %vm236, %v1622, 0
    %1626 = vmatprep.subr.bf16.mxu0 0
    %1627 = vmatpush1.bf16.msra.mxu0 %v1104
    %1628 = vmatprep.subr.bf16.mxu0 0
    %1629 = vmatpush1.bf16.msra.mxu0 %v1105
    %1630 = vmatprep.subr.bf16.mxu0 0
    %1631 = vmatpush1.bf16.msra.mxu0 0
    %1632 = vmatprep.subr.bf16.mxu0 0
    %1633 = vmatpush1.bf16.msra.mxu0 0
    %1634 = vmatprep.subr.bf16.mxu0 0
    %1635 = vmatpush1.bf16.msra.mxu0 0
    %1636 = vmatprep.subr.bf16.mxu0 0
    %1637 = vmatpush1.bf16.msra.mxu0 0
    %1638 = vmatprep.subr.bf16.mxu0 0
    %1639 = vmatpush1.bf16.msra.mxu0 0
    %1640 = vmatprep.subr.bf16.mxu0 0
    %1641 = vmatpush1.bf16.msra.mxu0 0
    %1642 = vmatprep.subr.bf16.mxu0 0
    %1643 = vmatpush1.bf16.msra.mxu0 0
    %1644 = vmatprep.subr.bf16.mxu0 0
    %1645 = vmatpush1.bf16.msra.mxu0 0
    %1646 = vmatprep.subr.bf16.mxu0 0
    %1647 = vmatpush1.bf16.msra.mxu0 0
    %1648 = vmatprep.subr.bf16.mxu0 0
    %1649 = vmatpush1.bf16.msra.mxu0 0
    %1650 = vmatprep.subr.bf16.mxu0 0
    %1651 = vmatpush1.bf16.msra.mxu0 0
    %1652 = vmatprep.subr.bf16.mxu0 0
    %1653 = vmatpush1.bf16.msra.mxu0 0
    %1654 = vmatprep.subr.bf16.mxu0 0
    %1655 = vmatpush1.bf16.msra.mxu0 0
    %1656 = vmatprep.subr.bf16.mxu0 0
    %1657 = vmatpush1.bf16.msra.mxu0 0
    %1658 = vmatprep.mubr.bf16.mxu0 0
    %1659 = vmatmul.mubr.bf16.gmra.mrb[0].mxu0 %v1624
    %v1660 = vpop.f32.mrb[0].mxu0
    %v1661 = vadd.f32 0.0, %v1660
    %v1662 = vpop.f32.mrb[0].mxu0
    %v1663 = vpop.f32.mrb[0].mxu0
    %v1664 = vpop.f32.mrb[0].mxu0
    %1665 = vdwg.mxu0
    %v1666 = vadd.f32 %v1618, %v1661
    %v1667 = vtanh.pop %v1666
    %v1668 = vmul.f32 %v245, %v1667
    %v1669 = vadd.f32 %v1668, %v246
    %v1670 = vmul.f32 %v1669, %v1606
    %1672 = vrot.lane.b32.xlu0 %v1669, 64
    %v1673 = vpop.permute.xlu0 %1672
    %v1675 = vmul.f32 %v1669, %v1673
    %1677 = vrot.lane.b32.xlu0 %v1675, 32
    %v1678 = vpop.permute.xlu0 %1677
    %v1680 = vadd.f32 %v1670, %v1678
    %v1681 = vtanh.pop %v1680
    %1683 = vrot.lane.b32.xlu0 %v1681, 64
    %v1684 = vpop.permute.xlu0 %1683
    %v1686 = vmul.f32 %v1669, %v1684
    %1688 = vrot.lane.b32.xlu0 %v1686, 32
    %v1689 = vpop.permute.xlu0 %1688
    %1691 = vst.msk [vmem:[#allocation2 + $0x38] sm:$0xff] %vm236, %v1689
    %v1692 = vld [vmem:[#allocation2] sm:$0xff]
    %v1693 = vld [vmem:[#allocation2 + $0x8] sm:$0xff]
    %v1694 = vld [vmem:[#allocation2 + $0x10] sm:$0xff]
    %v1695 = vld [vmem:[#allocation2 + $0x18] sm:$0xff]
    %v1696 = vld [vmem:[#allocation2 + $0x20] sm:$0xff]
    %v1697 = vld [vmem:[#allocation2 + $0x28] sm:$0xff]
    %v1698 = vld [vmem:[#allocation2 + $0x30] sm:$0xff]
    %v1699 = vld [vmem:[#allocation2 + $0x38] sm:$0xff]
    %v1700 = vpack.c.bf16 %v1693, %v1692
    %v1701 = vpack.c.bf16 %v1695, %v1694
    %v1702 = vpack.c.bf16 %v1697, %v1696
    %v1703 = vpack.c.bf16 %v1699, %v1698
    %v1704 = vld [vmem:[#allocation13] sm:$0xf]
    %v1705 = vld [vmem:[#allocation13 + $0x4] sm:$0xf]
    %v1706 = vld [vmem:[#allocation13 + $0x8] sm:$0xf]
    %v1707 = vld [vmem:[#allocation13 + $0xc] sm:$0xf]
    %v1708 = vld [vmem:[%s12] sm:$0x1]
    %v1710 = vlaneseq
    %v1711 = vshrl.u32 %v1710, 7
    %v1712 = vsub.s32 0, %v1711
    %v1713 = vrot.slane %v1708, %v1712
    %v1719 = vunpack.c.l.b16 %v1704
    %v1720 = vunpack.c.l.b16 %v1705
    %v1721 = vunpack.c.l.b16 %v1706
    %v1722 = vunpack.c.l.b16 %v1707
    %v1723 = vpack.c.b16 %v1720, %v1719
    %v1724 = vpack.c.b16 %v1722, %v1721
    %v1728 = vsel %vm236, %v1700, 0
    %v1731 = vsel %vm236, %v1701, 0
    %v1734 = vsel %vm236, %v1702, 0
    %v1737 = vsel %vm236, %v1703, 0
    %1739 = vmatprep.subr.bf16.mxu0 0
    %1740 = vmatpush1.bf16.msra.mxu0 %v1723
    %1741 = vmatprep.subr.bf16.mxu0 0
    %1742 = vmatpush1.bf16.msra.mxu0 %v1724
    %1743 = vmatprep.subr.bf16.mxu0 0
    %1744 = vmatpush1.bf16.msra.mxu0 0
    %1745 = vmatprep.subr.bf16.mxu0 0
    %1746 = vmatpush1.bf16.msra.mxu0 0
    %1747 = vmatprep.subr.bf16.mxu0 0
    %1748 = vmatpush1.bf16.msra.mxu0 0
    %1749 = vmatprep.subr.bf16.mxu0 0
    %1750 = vmatpush1.bf16.msra.mxu0 0
    %1751 = vmatprep.subr.bf16.mxu0 0
    %1752 = vmatpush1.bf16.msra.mxu0 0
    %1753 = vmatprep.subr.bf16.mxu0 0
    %1754 = vmatpush1.bf16.msra.mxu0 0
    %1755 = vmatprep.subr.bf16.mxu0 0
    %1756 = vmatpush1.bf16.msra.mxu0 0
    %1757 = vmatprep.subr.bf16.mxu0 0
    %1758 = vmatpush1.bf16.msra.mxu0 0
    %1759 = vmatprep.subr.bf16.mxu0 0
    %1760 = vmatpush1.bf16.msra.mxu0 0
    %1761 = vmatprep.subr.bf16.mxu0 0
    %1762 = vmatpush1.bf16.msra.mxu0 0
    %1763 = vmatprep.subr.bf16.mxu0 0
    %1764 = vmatpush1.bf16.msra.mxu0 0
    %1765 = vmatprep.subr.bf16.mxu0 0
    %1766 = vmatpush1.bf16.msra.mxu0 0
    %1767 = vmatprep.subr.bf16.mxu0 0
    %1768 = vmatpush1.bf16.msra.mxu0 0
    %1769 = vmatprep.subr.bf16.mxu0 0
    %1770 = vmatpush1.bf16.msra.mxu0 0
    %1771 = vmatprep.mubr.bf16.mxu0 0
    %1772 = vmatmul.mubr.bf16.gmra.mrb[0].mxu0 %v1728
    %v1773 = vpop.f32.mrb[0].mxu0
    %v1774 = vadd.f32 %v1713, %v1773
    %v1775 = vpop.f32.mrb[0].mxu0
    %v1776 = vpop.f32.mrb[0].mxu0
    %v1777 = vadd.f32 %v1713, %v1776
    %v1778 = vpop.f32.mrb[0].mxu0
    %1779 = vmatprep.mubr.bf16.mxu0 0
    %1780 = vmatmul.mubr.bf16.gmra.mrb[0].mxu0 %v1731
    %v1781 = vpop.f32.mrb[0].mxu0
    %v1782 = vadd.f32 %v1713, %v1781
    %v1783 = vpop.f32.mrb[0].mxu0
    %v1784 = vpop.f32.mrb[0].mxu0
    %v1785 = vadd.f32 %v1713, %v1784
    %v1786 = vpop.f32.mrb[0].mxu0
    %1787 = vmatprep.mubr.bf16.mxu0 0
    %1788 = vmatmul.mubr.bf16.gmra.mrb[0].mxu0 %v1734
    %v1789 = vpop.f32.mrb[0].mxu0
    %v1790 = vadd.f32 %v1713, %v1789
    %v1791 = vpop.f32.mrb[0].mxu0
    %v1792 = vpop.f32.mrb[0].mxu0
    %v1793 = vadd.f32 %v1713, %v1792
    %v1794 = vpop.f32.mrb[0].mxu0
    %1795 = vmatprep.mubr.bf16.mxu0 0
    %1796 = vmatmul.mubr.bf16.gmra.mrb[0].mxu0 %v1737
    %v1797 = vpop.f32.mrb[0].mxu0
    %v1798 = vadd.f32 %v1713, %v1797
    %v1799 = vpop.f32.mrb[0].mxu0
    %v1800 = vpop.f32.mrb[0].mxu0
    %v1801 = vadd.f32 %v1713, %v1800
    %v1802 = vpop.f32.mrb[0].mxu0
    %1803 = vdwg.mxu0
    %v1804 = vtanh.pop %v1774
    %v1805 = vtanh.pop %v1777
    %v1806 = vtanh.pop %v1782
    %v1807 = vtanh.pop %v1785
    %v1808 = vtanh.pop %v1790
    %v1809 = vtanh.pop %v1793
    %v1810 = vtanh.pop %v1798
    %v1811 = vtanh.pop %v1801
    %1812 = vst [vmem:[#allocation15] sm:$0xff] %v1804
    %1813 = vst [vmem:[#allocation15 + $0x8] sm:$0xff] %v1805
    %1814 = vst [vmem:[#allocation15 + $0x10] sm:$0xff] %v1806
    %1815 = vst [vmem:[#allocation15 + $0x18] sm:$0xff] %v1807
    %1816 = vst [vmem:[#allocation15 + $0x20] sm:$0xff] %v1808
    %1817 = vst [vmem:[#allocation15 + $0x28] sm:$0xff] %v1809
    %1818 = vst [vmem:[#allocation15 + $0x30] sm:$0xff] %v1810
    %1819 = vst [vmem:[#allocation15 + $0x38] sm:$0xff] %v1811
    // Predicated region
    $region78: #{tpu_custom_call.1} parent=1 // pred_check
      _
    $region79: #{tpu_custom_call.1} parent=1 // pred_check_branch
      %1821 = sbr.rel (0) target = $region81
    $region80: #{tpu_custom_call.1} parent=1 // pred_region
      %s1823 = ssub.s32 1024, 1024
      %1824 = vsyncadd [#allocation6], %s1823
      %s1825 = sshll.u32 [#allocation15], 4
      %s1826 = int_to_ptr.vmem [resolvable:$true] %s1825
      %1831 = dma.vmem_to_hbm [thread:$0]  %s1826, 1024, %s13, [#allocation6], 128, 128, 8
    $region81: #{tpu_custom_call.1} parent=1 // pred_fallthru
      _
    // Predicated region
    $region82: #{tpu_custom_call.1} parent=1 // pred_check
      _
    $region83: #{tpu_custom_call.1} parent=1 // pred_check_branch
      %1833 = sbr.rel (0) target = $region85
    $region84: #{tpu_custom_call.1} parent=1 // pred_region
      %1834 = dma.done [#allocation6], 1024
    $region85: #{tpu_custom_call.1} parent=1 // pred_fallthru
      _
    %1835 = vsyncpa [#allocation5], 1
    %1836 = vsyncpa [#allocation8], 1
    %1837 = vsyncpa [#allocation11], 1
    %1838 = vsyncpa [#allocation14], 1
    %1839 = vsyncpa [#allocation6], 1

</llo_original>
